<compile_context>
chip_gen: v7x
topology: tpu7x:2x2x1
jax: 0.10.0
libtpu: 0.0.40
codegen_flags: <defaults>
</compile_context>

<pallas_src>
import functools

import numpy as np
import jax
import jax.numpy as jnp
from jax.experimental import pallas as pl
from jax.experimental.pallas import tpu as pltpu

EPS = 1e-5            # nn.BatchNorm2d default
NEG_SLOPE = 0.01      # nn.LeakyReLU default
_MM_DTYPE = jnp.float32   # jnp.bfloat16 -> v6e/v7x MXU fast path (re-validate tol)


def _mm(a, b):
    """2-D MXU matmul with f32 accumulation (operand dtype switchable)."""
    return jnp.dot(a.astype(_MM_DTYPE), b.astype(_MM_DTYPE),
                   preferred_element_type=jnp.float32)


# ---------------------------------------------------------------------------
# Bicubic (antialias=True) resampling matrices - PIL / torch "aa" algorithm.
# ---------------------------------------------------------------------------
def _cubic_aa(x, a=-0.5):
    x = abs(x)
    if x < 1.0:
        return ((a + 2.0) * x - (a + 3.0)) * x * x + 1.0
    if x < 2.0:
        return (((x - 5.0) * x + 8.0) * x - 4.0) * a
    return 0.0


def resize_matrix(in_size, out_size):
    """Dense M (out, in), out = M @ in, matching
    F.interpolate(mode='bicubic', antialias=True, align_corners=False)."""
    scale = in_size / out_size
    fs = max(scale, 1.0)
    support = 2.0 * fs
    M = np.zeros((out_size, in_size), dtype=np.float64)
    for i in range(out_size):
        center = (i + 0.5) * scale
        xmin = max(int(center - support + 0.5), 0)
        xmax = min(int(center + support + 0.5), in_size)
        w = np.array([_cubic_aa((xx - center + 0.5) / fs) for xx in range(xmin, xmax)])
        M[i, xmin:xmax] = w / w.sum()
    return M.astype(np.float32)


# ---------------------------------------------------------------------------
# Host-side construction of structured operands (parameter glue).
# ---------------------------------------------------------------------------
def conv_band_matrices(w_oihw, W):
    """Fold a 3x3 zero-padded conv into 3 banded lane-mixing matrices B_kh of
    shape (C*W, C*W) acting on the (rows, C*W) layout (lane = c*W + w):
        y[h] = x[h-1] @ B_0 + x[h] @ B_1 + x[h+1] @ B_2   (out-of-range rows = 0)
    W-boundary zero padding is baked into the band structure."""
    C = w_oihw.shape[0]
    mats = np.zeros((3, C * W, C * W), dtype=np.float32)
    for kh in range(3):
        m = np.zeros((C * W, C * W), dtype=np.float64)
        for kw in range(3):
            # input lane (ci*W + wi) feeds output lane (co*W + wo), wi = wo + kw - 1
            m += np.kron(w_oihw[:, :, kh, kw].T.astype(np.float64),
                         np.eye(W, k=1 - kw))
        mats[kh] = m.astype(np.float32)
    return mats


def build_operands(w1_oihw, w2_oihw, gamma1, beta1, gamma2, beta2, N, H, W):
    """Precompute all Pallas-side operands for the lane-packed (H, N*C*W) layout."""
    C = w1_oihw.shape[0]
    eyeN = np.eye(N, dtype=np.float32)
    eyeNC = np.eye(N * C, dtype=np.float32)

    def batch_bands(w):
        b = conv_band_matrices(np.asarray(w), W)                      # (3, CW, CW)
        return np.stack([np.kron(eyeN, b[k]) for k in range(3)])      # (3, NCW, NCW)

    # per-channel averaging matrix across the whole batch (lanes sharing a channel)
    ch = np.tile(np.repeat(np.arange(C), W), N)                        # channel id per lane
    P = (ch[:, None] == ch[None, :]).astype(np.float32)               # (NCW, NCW)

    def ab_lanes(g, b):
        return np.stack([np.tile(np.repeat(np.asarray(g, np.float32), W), N),
                         np.tile(np.repeat(np.asarray(b, np.float32), W), N)])

    UW = resize_matrix(W, 2 * W)
    DW = resize_matrix(2 * W, W)
    return dict(
        B1=jnp.asarray(batch_bands(w1_oihw)),
        B2=jnp.asarray(batch_bands(w2_oihw)),
        P=jnp.asarray(P),
        ab1=jnp.asarray(ab_lanes(gamma1, beta1)),
        ab2=jnp.asarray(ab_lanes(gamma2, beta2)),
        uh=jnp.asarray(resize_matrix(H, 2 * H)),                               # (2H, H)
        uwb=jnp.asarray(np.kron(eyeNC, UW.T).astype(np.float32)),              # (NCW, NC*2W)
        dh=jnp.asarray(resize_matrix(2 * H, H)),                               # (H, 2H)
        dwb=jnp.asarray(np.kron(eyeNC, DW.T).astype(np.float32)),              # (NC*2W, NCW)
    )


# ---------------------------------------------------------------------------
# Fused Pallas kernel: conv1 -> BN1 -> CNO_LReLu -> conv2 -> BN2 -> residual
# ---------------------------------------------------------------------------
def _fused_kernel(x_ref, b1_ref, b2_ref, p_ref, ab1_ref, ab2_ref,
                  uh_ref, uw_ref, dh_ref, dw_ref, o_ref, *, H, inv_count):
    x = x_ref[...]                                           # (H, N*C*W)
    row = jax.lax.broadcasted_iota(jnp.int32, x.shape, 0)
    m_top = row != 0                                         # rows where x[h-1] exists
    m_bot = row != (H - 1)                                   # rows where x[h+1] exists

    def conv3x3(z, b_ref):
        # Row halo on the XLU (roll) + zero-pad masks; kw/channel mixing as
        # banded lane-mixing GEMMs on the MXU.
        zd = jnp.where(m_top, pltpu.roll(z, 1, 0), 0.0)      # zd[h] = z[h-1]
        zu = jnp.where(m_bot, pltpu.roll(z, H - 1, 0), 0.0)  # zu[h] = z[h+1]
        return _mm(zd, b_ref[0]) + _mm(z, b_ref[1]) + _mm(zu, b_ref[2])

    def bn(z, ab_ref):
        # Whole batch is resident -> exact single-shot stats, centered variance.
        s = jnp.sum(z, axis=0, keepdims=True)                            # (1, NCW)
        mean = jnp.dot(s, p_ref[...], preferred_element_type=jnp.float32) * inv_count
        d = z - mean
        q = jnp.sum(d * d, axis=0, keepdims=True)
        var = jnp.dot(q, p_ref[...], preferred_element_type=jnp.float32) * inv_count
        ab = ab_ref[...]
        return d * (ab[0:1, :] * jax.lax.rsqrt(var + EPS)) + ab[1:2, :]

    # conv1 + BN1
    y = bn(conv3x3(x, b1_ref), ab1_ref)

    # CNO_LReLu: bicubic-aa up x2 (row GEMM + block-diag column GEMM),
    # LeakyReLU, bicubic-aa down.
    u = _mm(uh_ref[...], y)                                  # (2H, NCW)
    u = _mm(u, uw_ref[...])                                  # (2H, NC*2W)
    u = jnp.where(u >= 0, u, NEG_SLOPE * u)
    d = _mm(dh_ref[...], u)                                  # (H, NC*2W)
    d = _mm(d, dw_ref[...])                                  # (H, NCW)

    # conv2 + BN2 + residual
    y2 = bn(conv3x3(d, b2_ref), ab2_ref)
    o_ref[...] = x + y2


# ---------------------------------------------------------------------------
# Forward wrapper (NCHW-facing API; layout transposes only at the boundary)
# ---------------------------------------------------------------------------
def residual_block_forward(x_nchw, ops):
    N, C, H, W = x_nchw.shape
    NCW = N * C * W
    # lane = n*C*W + c*W + w  (samples packed into lanes -> 128-lane dense vregs)
    xl = jnp.transpose(x_nchw, (2, 0, 1, 3)).reshape(H, NCW)

    kernel = functools.partial(_fused_kernel, H=H, inv_count=1.0 / float(N * H * W))

    def _c(shape):
        nd = len(shape)
        return pl.BlockSpec(shape, lambda i, _nd=nd: (0,) * _nd)

    out = pl.pallas_call(
        kernel,
        grid=(1,),
        in_specs=[
            _c(xl.shape),
            _c(ops["B1"].shape), _c(ops["B2"].shape),
            _c(ops["P"].shape),
            _c(ops["ab1"].shape), _c(ops["ab2"].shape),
            _c(ops["uh"].shape), _c(ops["uwb"].shape),
            _c(ops["dh"].shape), _c(ops["dwb"].shape),
        ],
        out_shape=jax.ShapeDtypeStruct((H, NCW), jnp.float32),
        out_specs=_c((H, NCW)),
        compiler_params=pltpu.CompilerParams(
            dimension_semantics=("arbitrary",),
            vmem_limit_bytes=32 * 1024 * 1024,   # safe on v5e/v6e/v7x; usage << limit
        ),
    )(xl, ops["B1"], ops["B2"], ops["P"], ops["ab1"], ops["ab2"],
      ops["uh"], ops["uwb"], ops["dh"], ops["dwb"])

    return jnp.transpose(out.reshape(H, N, C, W), (1, 2, 0, 3))   # back to NCHW


# ---------------------------------------------------------------------------
# Pure-JAX reference (independent of the lane-layout construction)
# ---------------------------------------------------------------------------
def reference_forward(x, w1, w2, uh, uw, dh, dw):
    hp = jax.lax.Precision.HIGHEST

    def conv(z, w):
        return jax.lax.conv_general_dilated(
            z, w, window_strides=(1, 1), padding="SAME",
            dimension_numbers=("NCHW", "OIHW", "NCHW"), precision=hp)

    def bn(z):
        m = jnp.mean(z, axis=(0, 2, 3), keepdims=True)
        v = jnp.mean((z - m) ** 2, axis=(0, 2, 3), keepdims=True)
        return (z - m) / jnp.sqrt(v + EPS)

    y = bn(conv(x, w1))
    up = jnp.einsum("qh,nchw,pw->ncqp", uh, y, uw, precision=hp)
    up = jnp.where(up >= 0, up, NEG_SLOPE * up)
    dn = jnp.einsum("hq,ncqp,wp->nchw", dh, up, dw, precision=hp)
    return x + bn(conv(dn, w2))


if __name__ == "__main__":
    key = jax.random.PRNGKey(0)
    kx, k1, k2 = jax.random.split(key, 3)
    N, C, H, W = 2, 4, 16, 16

    x = jax.random.normal(kx, (N, C, H, W), jnp.float32)
    bound = 1.0 / np.sqrt(C * 3 * 3)                 # torch Conv2d default-ish bound
    w1 = jax.random.uniform(k1, (C, C, 3, 3), jnp.float32, -bound, bound)
    w2 = jax.random.uniform(k2, (C, C, 3, 3), jnp.float32, -bound, bound)
    gamma1 = np.ones(C, np.float32); beta1 = np.zeros(C, np.float32)
    gamma2 = np.ones(C, np.float32); beta2 = np.zeros(C, np.float32)

    ops = build_operands(np.asarray(w1), np.asarray(w2),
                         gamma1, beta1, gamma2, beta2, N, H, W)

    fwd = jax.jit(residual_block_forward)
    out = jax.block_until_ready(fwd(x, ops))
    assert out.shape == (N, C, H, W) and out.dtype == jnp.float32

    ref = reference_forward(
        x, w1, w2,
        jnp.asarray(resize_matrix(H, 2 * H)), jnp.asarray(resize_matrix(W, 2 * W)),
        jnp.asarray(resize_matrix(2 * H, H)), jnp.asarray(resize_matrix(2 * W, W)))
    err = float(jnp.max(jnp.abs(out - ref)))
    if not np.isfinite(err) or err > 1e-2:
        raise AssertionError(f"Pallas output mismatch vs JAX reference, max |diff| = {err}")
    print("KERNEL_OK")
</pallas_src>

<mosaic_0001>
module attributes {stable_mosaic.version = 11 : i64} {
  func.func @_fused_kernel(%arg0: i32, %arg1: memref<16x128xf32, #tpu.memory_space<vmem>>, %arg2: memref<3x128x128xf32, #tpu.memory_space<vmem>>, %arg3: memref<3x128x128xf32, #tpu.memory_space<vmem>>, %arg4: memref<128x128xf32, #tpu.memory_space<vmem>>, %arg5: memref<2x128xf32, #tpu.memory_space<vmem>>, %arg6: memref<2x128xf32, #tpu.memory_space<vmem>>, %arg7: memref<32x16xf32, #tpu.memory_space<vmem>>, %arg8: memref<128x256xf32, #tpu.memory_space<vmem>>, %arg9: memref<16x32xf32, #tpu.memory_space<vmem>>, %arg10: memref<256x128xf32, #tpu.memory_space<vmem>>, %arg11: memref<16x128xf32, #tpu.memory_space<vmem>>) attributes {dimension_semantics = [#tpu.dimension_semantics<arbitrary>], iteration_bounds = array<i64: 1>, scalar_prefetch = 0 : i64, scratch_operands = 0 : i64, tpu.core_type = #tpu.core_type<tc>, window_params = [{pipeline_mode = #tpu.pipeline_mode<synchronous>, transform_indices = @transform_0, window_bounds = array<i64: 16, 128>}, {pipeline_mode = #tpu.pipeline_mode<synchronous>, transform_indices = @transform_1, window_bounds = array<i64: 3, 128, 128>}, {pipeline_mode = #tpu.pipeline_mode<synchronous>, transform_indices = @transform_2, window_bounds = array<i64: 3, 128, 128>}, {pipeline_mode = #tpu.pipeline_mode<synchronous>, transform_indices = @transform_3, window_bounds = array<i64: 128, 128>}, {pipeline_mode = #tpu.pipeline_mode<synchronous>, transform_indices = @transform_4, window_bounds = array<i64: 2, 128>}, {pipeline_mode = #tpu.pipeline_mode<synchronous>, transform_indices = @transform_5, window_bounds = array<i64: 2, 128>}, {pipeline_mode = #tpu.pipeline_mode<synchronous>, transform_indices = @transform_6, window_bounds = array<i64: 32, 16>}, {pipeline_mode = #tpu.pipeline_mode<synchronous>, transform_indices = @transform_7, window_bounds = array<i64: 128, 256>}, {pipeline_mode = #tpu.pipeline_mode<synchronous>, transform_indices = @transform_8, window_bounds = array<i64: 16, 32>}, {pipeline_mode = #tpu.pipeline_mode<synchronous>, transform_indices = @transform_9, window_bounds = array<i64: 256, 128>}, {pipeline_mode = #tpu.pipeline_mode<synchronous>, transform_indices = @transform_10, window_bounds = array<i64: 16, 128>}]} {
    %c0 = arith.constant 0 : index
    %c0_0 = arith.constant 0 : index
    %0 = vector.load %arg1[%c0, %c0_0] : memref<16x128xf32, #tpu.memory_space<vmem>>, vector<16x128xf32>
    %1 = tpu.iota {dimensions = array<i32: 0>} : vector<16x128xi32>
    %c0_i32 = arith.constant 0 : i32
    %2 = vector.broadcast %c0_i32 : i32 to vector<16x128xi32>
    %3 = arith.cmpi ne, %1, %2 : vector<16x128xi32>
    %c15_i32 = arith.constant 15 : i32
    %4 = vector.broadcast %c15_i32 : i32 to vector<16x128xi32>
    %5 = arith.cmpi ne, %1, %4 : vector<16x128xi32>
    %c1_i32 = arith.constant 1 : i32
    %6 = tpu.dynamic_rotate %0 by %c1_i32 dim 0 : vector<16x128xf32>, i32 -> vector<16x128xf32>
    %cst = arith.constant 0.000000e+00 : f32
    %7 = vector.broadcast %cst : f32 to vector<16x128xf32>
    %8 = arith.select %3, %6, %7 : vector<16x128xi1>, vector<16x128xf32>
    %c15_i32_1 = arith.constant 15 : i32
    %9 = tpu.dynamic_rotate %0 by %c15_i32_1 dim 0 : vector<16x128xf32>, i32 -> vector<16x128xf32>
    %cst_2 = arith.constant 0.000000e+00 : f32
    %10 = vector.broadcast %cst_2 : f32 to vector<16x128xf32>
    %11 = arith.select %5, %9, %10 : vector<16x128xi1>, vector<16x128xf32>
    %c0_3 = arith.constant 0 : index
    %c0_4 = arith.constant 0 : index
    %c0_5 = arith.constant 0 : index
    %12 = vector.load %arg2[%c0_3, %c0_4, %c0_5] : memref<3x128x128xf32, #tpu.memory_space<vmem>>, vector<1x128x128xf32>
    %13 = vector.shape_cast %12 : vector<1x128x128xf32> to vector<128x128xf32>
    %cst_6 = arith.constant dense<0.000000e+00> : vector<16x128xf32>
    %14 = tpu.matmul %8, %13, %cst_6 {dimension_numbers = #tpu.dot_dimension_numbers<[1], [0], [0], [1], [0, 0, 1, 1], [], []>} : vector<16x128xf32>, vector<128x128xf32>, vector<16x128xf32> -> vector<16x128xf32>
    %c1 = arith.constant 1 : index
    %c0_7 = arith.constant 0 : index
    %c0_8 = arith.constant 0 : index
    %15 = vector.load %arg2[%c1, %c0_7, %c0_8] : memref<3x128x128xf32, #tpu.memory_space<vmem>>, vector<1x128x128xf32>
    %16 = vector.shape_cast %15 : vector<1x128x128xf32> to vector<128x128xf32>
    %cst_9 = arith.constant dense<0.000000e+00> : vector<16x128xf32>
    %17 = tpu.matmul %0, %16, %cst_9 {dimension_numbers = #tpu.dot_dimension_numbers<[1], [0], [0], [1], [0, 0, 1, 1], [], []>} : vector<16x128xf32>, vector<128x128xf32>, vector<16x128xf32> -> vector<16x128xf32>
    %18 = arith.addf %14, %17 : vector<16x128xf32>
    %c2 = arith.constant 2 : index
    %c0_10 = arith.constant 0 : index
    %c0_11 = arith.constant 0 : index
    %19 = vector.load %arg2[%c2, %c0_10, %c0_11] : memref<3x128x128xf32, #tpu.memory_space<vmem>>, vector<1x128x128xf32>
    %20 = vector.shape_cast %19 : vector<1x128x128xf32> to vector<128x128xf32>
    %cst_12 = arith.constant dense<0.000000e+00> : vector<16x128xf32>
    %21 = tpu.matmul %11, %20, %cst_12 {dimension_numbers = #tpu.dot_dimension_numbers<[1], [0], [0], [1], [0, 0, 1, 1], [], []>} : vector<16x128xf32>, vector<128x128xf32>, vector<16x128xf32> -> vector<16x128xf32>
    %22 = arith.addf %18, %21 : vector<16x128xf32>
    %cst_13 = arith.constant dense<0.000000e+00> : vector<128xf32>
    %23 = vector.multi_reduction <add>, %22, %cst_13 [0] : vector<16x128xf32> to vector<128xf32>
    %24 = vector.shape_cast %23 : vector<128xf32> to vector<1x128xf32>
    %c0_14 = arith.constant 0 : index
    %c0_15 = arith.constant 0 : index
    %25 = vector.load %arg4[%c0_14, %c0_15] : memref<128x128xf32, #tpu.memory_space<vmem>>, vector<128x128xf32>
    %cst_16 = arith.constant dense<0.000000e+00> : vector<1x128xf32>
    %26 = tpu.matmul %24, %25, %cst_16 {dimension_numbers = #tpu.dot_dimension_numbers<[1], [0], [0], [1], [0, 0, 1, 1], [], []>} : vector<1x128xf32>, vector<128x128xf32>, vector<1x128xf32> -> vector<1x128xf32>
    %cst_17 = arith.constant 0.001953125 : f32
    %27 = vector.broadcast %cst_17 : f32 to vector<1x128xf32>
    %28 = arith.mulf %26, %27 : vector<1x128xf32>
    %29 = vector.broadcast %28 : vector<1x128xf32> to vector<16x128xf32>
    %30 = arith.subf %22, %29 : vector<16x128xf32>
    %31 = arith.mulf %30, %30 : vector<16x128xf32>
    %cst_18 = arith.constant dense<0.000000e+00> : vector<128xf32>
    %32 = vector.multi_reduction <add>, %31, %cst_18 [0] : vector<16x128xf32> to vector<128xf32>
    %33 = vector.shape_cast %32 : vector<128xf32> to vector<1x128xf32>
    %c0_19 = arith.constant 0 : index
    %c0_20 = arith.constant 0 : index
    %34 = vector.load %arg4[%c0_19, %c0_20] : memref<128x128xf32, #tpu.memory_space<vmem>>, vector<128x128xf32>
    %cst_21 = arith.constant dense<0.000000e+00> : vector<1x128xf32>
    %35 = tpu.matmul %33, %34, %cst_21 {dimension_numbers = #tpu.dot_dimension_numbers<[1], [0], [0], [1], [0, 0, 1, 1], [], []>} : vector<1x128xf32>, vector<128x128xf32>, vector<1x128xf32> -> vector<1x128xf32>
    %cst_22 = arith.constant 0.001953125 : f32
    %36 = vector.broadcast %cst_22 : f32 to vector<1x128xf32>
    %37 = arith.mulf %35, %36 : vector<1x128xf32>
    %c0_23 = arith.constant 0 : index
    %c0_24 = arith.constant 0 : index
    %38 = vector.load %arg5[%c0_23, %c0_24] : memref<2x128xf32, #tpu.memory_space<vmem>>, vector<2x128xf32>
    %39 = vector.extract_strided_slice %38 {offsets = [0, 0], sizes = [1, 128], strides = [1, 1]} : vector<2x128xf32> to vector<1x128xf32>
    %cst_25 = arith.constant 9.99999974E-6 : f32
    %40 = vector.broadcast %cst_25 : f32 to vector<1x128xf32>
    %41 = arith.addf %37, %40 : vector<1x128xf32>
    %42 = math.rsqrt %41 : vector<1x128xf32>
    %43 = arith.mulf %39, %42 : vector<1x128xf32>
    %44 = vector.broadcast %43 : vector<1x128xf32> to vector<16x128xf32>
    %45 = arith.mulf %30, %44 : vector<16x128xf32>
    %46 = vector.extract_strided_slice %38 {offsets = [1, 0], sizes = [1, 128], strides = [1, 1]} : vector<2x128xf32> to vector<1x128xf32>
    %47 = vector.broadcast %46 : vector<1x128xf32> to vector<16x128xf32>
    %48 = arith.addf %45, %47 : vector<16x128xf32>
    %c0_26 = arith.constant 0 : index
    %c0_27 = arith.constant 0 : index
    %49 = vector.load %arg7[%c0_26, %c0_27] : memref<32x16xf32, #tpu.memory_space<vmem>>, vector<32x16xf32>
    %cst_28 = arith.constant dense<0.000000e+00> : vector<32x128xf32>
    %50 = tpu.matmul %49, %48, %cst_28 {dimension_numbers = #tpu.dot_dimension_numbers<[1], [0], [0], [1], [0, 0, 1, 1], [], []>} : vector<32x16xf32>, vector<16x128xf32>, vector<32x128xf32> -> vector<32x128xf32>
    %c0_29 = arith.constant 0 : index
    %c0_30 = arith.constant 0 : index
    %51 = vector.load %arg8[%c0_29, %c0_30] : memref<128x256xf32, #tpu.memory_space<vmem>>, vector<128x256xf32>
    %cst_31 = arith.constant dense<0.000000e+00> : vector<32x256xf32>
    %52 = tpu.matmul %50, %51, %cst_31 {dimension_numbers = #tpu.dot_dimension_numbers<[1], [0], [0], [1], [0, 0, 1, 1], [], []>} : vector<32x128xf32>, vector<128x256xf32>, vector<32x256xf32> -> vector<32x256xf32>
    %cst_32 = arith.constant 0.000000e+00 : f32
    %53 = vector.broadcast %cst_32 : f32 to vector<32x256xf32>
    %54 = arith.cmpf oge, %52, %53 : vector<32x256xf32>
    %cst_33 = arith.constant 0.00999999977 : f32
    %55 = vector.broadcast %cst_33 : f32 to vector<32x256xf32>
    %56 = arith.mulf %55, %52 : vector<32x256xf32>
    %57 = arith.select %54, %52, %56 : vector<32x256xi1>, vector<32x256xf32>
    %c0_34 = arith.constant 0 : index
    %c0_35 = arith.constant 0 : index
    %58 = vector.load %arg9[%c0_34, %c0_35] : memref<16x32xf32, #tpu.memory_space<vmem>>, vector<16x32xf32>
    %cst_36 = arith.constant dense<0.000000e+00> : vector<16x256xf32>
    %59 = tpu.matmul %58, %57, %cst_36 {dimension_numbers = #tpu.dot_dimension_numbers<[1], [0], [0], [1], [0, 0, 1, 1], [], []>} : vector<16x32xf32>, vector<32x256xf32>, vector<16x256xf32> -> vector<16x256xf32>
    %c0_37 = arith.constant 0 : index
    %c0_38 = arith.constant 0 : index
    %60 = vector.load %arg10[%c0_37, %c0_38] : memref<256x128xf32, #tpu.memory_space<vmem>>, vector<256x128xf32>
    %cst_39 = arith.constant dense<0.000000e+00> : vector<16x128xf32>
    %61 = tpu.matmul %59, %60, %cst_39 {dimension_numbers = #tpu.dot_dimension_numbers<[1], [0], [0], [1], [0, 0, 1, 1], [], []>} : vector<16x256xf32>, vector<256x128xf32>, vector<16x128xf32> -> vector<16x128xf32>
    %c1_i32_40 = arith.constant 1 : i32
    %62 = tpu.dynamic_rotate %61 by %c1_i32_40 dim 0 : vector<16x128xf32>, i32 -> vector<16x128xf32>
    %cst_41 = arith.constant 0.000000e+00 : f32
    %63 = vector.broadcast %cst_41 : f32 to vector<16x128xf32>
    %64 = arith.select %3, %62, %63 : vector<16x128xi1>, vector<16x128xf32>
    %c15_i32_42 = arith.constant 15 : i32
    %65 = tpu.dynamic_rotate %61 by %c15_i32_42 dim 0 : vector<16x128xf32>, i32 -> vector<16x128xf32>
    %cst_43 = arith.constant 0.000000e+00 : f32
    %66 = vector.broadcast %cst_43 : f32 to vector<16x128xf32>
    %67 = arith.select %5, %65, %66 : vector<16x128xi1>, vector<16x128xf32>
    %c0_44 = arith.constant 0 : index
    %c0_45 = arith.constant 0 : index
    %c0_46 = arith.constant 0 : index
    %68 = vector.load %arg3[%c0_44, %c0_45, %c0_46] : memref<3x128x128xf32, #tpu.memory_space<vmem>>, vector<1x128x128xf32>
    %69 = vector.shape_cast %68 : vector<1x128x128xf32> to vector<128x128xf32>
    %cst_47 = arith.constant dense<0.000000e+00> : vector<16x128xf32>
    %70 = tpu.matmul %64, %69, %cst_47 {dimension_numbers = #tpu.dot_dimension_numbers<[1], [0], [0], [1], [0, 0, 1, 1], [], []>} : vector<16x128xf32>, vector<128x128xf32>, vector<16x128xf32> -> vector<16x128xf32>
    %c1_48 = arith.constant 1 : index
    %c0_49 = arith.constant 0 : index
    %c0_50 = arith.constant 0 : index
    %71 = vector.load %arg3[%c1_48, %c0_49, %c0_50] : memref<3x128x128xf32, #tpu.memory_space<vmem>>, vector<1x128x128xf32>
    %72 = vector.shape_cast %71 : vector<1x128x128xf32> to vector<128x128xf32>
    %cst_51 = arith.constant dense<0.000000e+00> : vector<16x128xf32>
    %73 = tpu.matmul %61, %72, %cst_51 {dimension_numbers = #tpu.dot_dimension_numbers<[1], [0], [0], [1], [0, 0, 1, 1], [], []>} : vector<16x128xf32>, vector<128x128xf32>, vector<16x128xf32> -> vector<16x128xf32>
    %74 = arith.addf %70, %73 : vector<16x128xf32>
    %c2_52 = arith.constant 2 : index
    %c0_53 = arith.constant 0 : index
    %c0_54 = arith.constant 0 : index
    %75 = vector.load %arg3[%c2_52, %c0_53, %c0_54] : memref<3x128x128xf32, #tpu.memory_space<vmem>>, vector<1x128x128xf32>
    %76 = vector.shape_cast %75 : vector<1x128x128xf32> to vector<128x128xf32>
    %cst_55 = arith.constant dense<0.000000e+00> : vector<16x128xf32>
    %77 = tpu.matmul %67, %76, %cst_55 {dimension_numbers = #tpu.dot_dimension_numbers<[1], [0], [0], [1], [0, 0, 1, 1], [], []>} : vector<16x128xf32>, vector<128x128xf32>, vector<16x128xf32> -> vector<16x128xf32>
    %78 = arith.addf %74, %77 : vector<16x128xf32>
    %cst_56 = arith.constant dense<0.000000e+00> : vector<128xf32>
    %79 = vector.multi_reduction <add>, %78, %cst_56 [0] : vector<16x128xf32> to vector<128xf32>
    %80 = vector.shape_cast %79 : vector<128xf32> to vector<1x128xf32>
    %c0_57 = arith.constant 0 : index
    %c0_58 = arith.constant 0 : index
    %81 = vector.load %arg4[%c0_57, %c0_58] : memref<128x128xf32, #tpu.memory_space<vmem>>, vector<128x128xf32>
    %cst_59 = arith.constant dense<0.000000e+00> : vector<1x128xf32>
    %82 = tpu.matmul %80, %81, %cst_59 {dimension_numbers = #tpu.dot_dimension_numbers<[1], [0], [0], [1], [0, 0, 1, 1], [], []>} : vector<1x128xf32>, vector<128x128xf32>, vector<1x128xf32> -> vector<1x128xf32>
    %cst_60 = arith.constant 0.001953125 : f32
    %83 = vector.broadcast %cst_60 : f32 to vector<1x128xf32>
    %84 = arith.mulf %82, %83 : vector<1x128xf32>
    %85 = vector.broadcast %84 : vector<1x128xf32> to vector<16x128xf32>
    %86 = arith.subf %78, %85 : vector<16x128xf32>
    %87 = arith.mulf %86, %86 : vector<16x128xf32>
    %cst_61 = arith.constant dense<0.000000e+00> : vector<128xf32>
    %88 = vector.multi_reduction <add>, %87, %cst_61 [0] : vector<16x128xf32> to vector<128xf32>
    %89 = vector.shape_cast %88 : vector<128xf32> to vector<1x128xf32>
    %c0_62 = arith.constant 0 : index
    %c0_63 = arith.constant 0 : index
    %90 = vector.load %arg4[%c0_62, %c0_63] : memref<128x128xf32, #tpu.memory_space<vmem>>, vector<128x128xf32>
    %cst_64 = arith.constant dense<0.000000e+00> : vector<1x128xf32>
    %91 = tpu.matmul %89, %90, %cst_64 {dimension_numbers = #tpu.dot_dimension_numbers<[1], [0], [0], [1], [0, 0, 1, 1], [], []>} : vector<1x128xf32>, vector<128x128xf32>, vector<1x128xf32> -> vector<1x128xf32>
    %cst_65 = arith.constant 0.001953125 : f32
    %92 = vector.broadcast %cst_65 : f32 to vector<1x128xf32>
    %93 = arith.mulf %91, %92 : vector<1x128xf32>
    %c0_66 = arith.constant 0 : index
    %c0_67 = arith.constant 0 : index
    %94 = vector.load %arg6[%c0_66, %c0_67] : memref<2x128xf32, #tpu.memory_space<vmem>>, vector<2x128xf32>
    %95 = vector.extract_strided_slice %94 {offsets = [0, 0], sizes = [1, 128], strides = [1, 1]} : vector<2x128xf32> to vector<1x128xf32>
    %cst_68 = arith.constant 9.99999974E-6 : f32
    %96 = vector.broadcast %cst_68 : f32 to vector<1x128xf32>
    %97 = arith.addf %93, %96 : vector<1x128xf32>
    %98 = math.rsqrt %97 : vector<1x128xf32>
    %99 = arith.mulf %95, %98 : vector<1x128xf32>
    %100 = vector.broadcast %99 : vector<1x128xf32> to vector<16x128xf32>
    %101 = arith.mulf %86, %100 : vector<16x128xf32>
    %102 = vector.extract_strided_slice %94 {offsets = [1, 0], sizes = [1, 128], strides = [1, 1]} : vector<2x128xf32> to vector<1x128xf32>
    %103 = vector.broadcast %102 : vector<1x128xf32> to vector<16x128xf32>
    %104 = arith.addf %101, %103 : vector<16x128xf32>
    %105 = arith.addf %0, %104 : vector<16x128xf32>
    %c0_69 = arith.constant 0 : index
    %c0_70 = arith.constant 0 : index
    %106 = vector.load %arg11[%c0_69, %c0_70] : memref<16x128xf32, #tpu.memory_space<vmem>>, vector<16x128xf32>
    tpu.vector_store %arg11[%c0_69, %c0_70], %105 {strides = array<i32>} : memref<16x128xf32, #tpu.memory_space<vmem>>, vector<16x128xf32>,
    return
  }
  func.func @transform_0(%arg0: i32) -> (i32, i32) {
    %c0_i32 = arith.constant 0 : i32
    %c0_i32_0 = arith.constant 0 : i32
    %c0_i32_1 = arith.constant 0 : i32
    return %c0_i32, %c0_i32_0 : i32, i32
  }
  func.func @transform_1(%arg0: i32) -> (i32, i32, i32) {
    %c0_i32 = arith.constant 0 : i32
    %c0_i32_0 = arith.constant 0 : i32
    %c0_i32_1 = arith.constant 0 : i32
    %c0_i32_2 = arith.constant 0 : i32
    return %c0_i32, %c0_i32_0, %c0_i32_1 : i32, i32, i32
  }
  func.func @transform_2(%arg0: i32) -> (i32, i32, i32) {
    %c0_i32 = arith.constant 0 : i32
    %c0_i32_0 = arith.constant 0 : i32
    %c0_i32_1 = arith.constant 0 : i32
    %c0_i32_2 = arith.constant 0 : i32
    return %c0_i32, %c0_i32_0, %c0_i32_1 : i32, i32, i32
  }
  func.func @transform_3(%arg0: i32) -> (i32, i32) {
    %c0_i32 = arith.constant 0 : i32
    %c0_i32_0 = arith.constant 0 : i32
    %c0_i32_1 = arith.constant 0 : i32
    return %c0_i32, %c0_i32_0 : i32, i32
  }
  func.func @transform_4(%arg0: i32) -> (i32, i32) {
    %c0_i32 = arith.constant 0 : i32
    %c0_i32_0 = arith.constant 0 : i32
    %c0_i32_1 = arith.constant 0 : i32
    return %c0_i32, %c0_i32_0 : i32, i32
  }
  func.func @transform_5(%arg0: i32) -> (i32, i32) {
    %c0_i32 = arith.constant 0 : i32
    %c0_i32_0 = arith.constant 0 : i32
    %c0_i32_1 = arith.constant 0 : i32
    return %c0_i32, %c0_i32_0 : i32, i32
  }
  func.func @transform_6(%arg0: i32) -> (i32, i32) {
    %c0_i32 = arith.constant 0 : i32
    %c0_i32_0 = arith.constant 0 : i32
    %c0_i32_1 = arith.constant 0 : i32
    return %c0_i32, %c0_i32_0 : i32, i32
  }
  func.func @transform_7(%arg0: i32) -> (i32, i32) {
    %c0_i32 = arith.constant 0 : i32
    %c0_i32_0 = arith.constant 0 : i32
    %c0_i32_1 = arith.constant 0 : i32
    return %c0_i32, %c0_i32_0 : i32, i32
  }
  func.func @transform_8(%arg0: i32) -> (i32, i32) {
    %c0_i32 = arith.constant 0 : i32
    %c0_i32_0 = arith.constant 0 : i32
    %c0_i32_1 = arith.constant 0 : i32
    return %c0_i32, %c0_i32_0 : i32, i32
  }
  func.func @transform_9(%arg0: i32) -> (i32, i32) {
    %c0_i32 = arith.constant 0 : i32
    %c0_i32_0 = arith.constant 0 : i32
    %c0_i32_1 = arith.constant 0 : i32
    return %c0_i32, %c0_i32_0 : i32, i32
  }
  func.func @transform_10(%arg0: i32) -> (i32, i32) {
    %c0_i32 = arith.constant 0 : i32
    %c0_i32_0 = arith.constant 0 : i32
    %c0_i32_1 = arith.constant 0 : i32
    return %c0_i32, %c0_i32_0 : i32, i32
  }
}

</mosaic_0001>

<llo_original>
// kernel: residual_block_forward.1
$region0: #{residual_block_forward.1}
  #allocation0 [shape = 'u32[]', space=smem, size = 0x4, offset = 0x4, fixed_abs, tag = 'smem constant byte address 0x4 - core index']
  #allocation1 [shape = 'u32[144,128]{1,0:T(1,128)}', space=vmem, size = 0x12000, scoped, tag = 'internal scratch']
  %s0 = inlined_call_operand.vmem [shape: f32[16,128], index: 0, kind: input, shape index: {}]
  %s1 = inlined_call_operand.vmem [shape: f32[3,128,128], index: 1, kind: input, shape index: {}]
  %s2 = inlined_call_operand.hbm [shape: f32[3,128,128], index: 2, kind: input, shape index: {}]
  %s3 = inlined_call_operand.hbm [shape: f32[128,128], index: 3, kind: input, shape index: {}]
  %s4 = inlined_call_operand.vmem [shape: f32[2,128], index: 4, kind: input, shape index: {}]
  %s5 = inlined_call_operand.vmem [shape: f32[2,128], index: 5, kind: input, shape index: {}]
  %s6 = inlined_call_operand.vmem [shape: f32[32,16], index: 6, kind: input, shape index: {}]
  %s7 = inlined_call_operand.hbm [shape: f32[128,256], index: 7, kind: input, shape index: {}]
  %s8 = inlined_call_operand.vmem [shape: f32[16,32], index: 8, kind: input, shape index: {}]
  %s9 = inlined_call_operand.hbm [shape: f32[256,128], index: 9, kind: input, shape index: {}]
  %s10 = inlined_call_operand.vmem [shape: f32[16,128], index: 10, kind: output, shape index: {}]
  %s11 = sld [smem:[#allocation0]]
  $region66: #{residual_block_forward.1} parent=0
    _
  %s13 = ssub.s32 1, %s11
  %s14 = scalar_select 0, %s13, %s11
  $region1: #{residual_block_forward.1} parent=0
    #allocation2 [shape = 'u8[196608]{0}', space=vmem, size = 0x30000, scoped, tag = 'input window, operand 2, single buffered']
    #allocation3 [shape = 's32[1]{0}', space=sflag, size = 0x4, scoped, tag = 'scoped memory for residual_block_forward.1']
    #allocation4 [shape = 'u8[65536]{0}', space=vmem, size = 0x10000, scoped, tag = 'input window, operand 3, single buffered']
    #allocation5 [shape = 's32[1]{0}', space=sflag, size = 0x4, scoped, tag = 'scoped memory for residual_block_forward.1']
    #allocation6 [shape = 'u8[131072]{0}', space=vmem, size = 0x20000, scoped, tag = 'input window, operand 7, single buffered']
    #allocation7 [shape = 'u8[131072]{0}', space=vmem, size = 0x20000, scoped, tag = 'input window, operand 9, single buffered']
    #allocation8 [shape = 's32[1]{0}', space=sflag, size = 0x4, scoped, tag = 'scoped memory for residual_block_forward.1']
    %15 = vsyncpa [#allocation3], 0
    %16 = vsyncpa [#allocation5], 0
    %17 = vsyncpa [#allocation8], 0
    // Predicated region
    $region2: #{residual_block_forward.1} parent=1 // pred_check
      _
    $region3: #{residual_block_forward.1} parent=1 // pred_check_branch
      %19 = sbr.rel (0) target = $region5
    $region4: #{residual_block_forward.1} parent=1 // pred_region
      _
    $region5: #{residual_block_forward.1} parent=1 // pred_fallthru
      _
    // Predicated region
    $region6: #{residual_block_forward.1} parent=1 // pred_check
      _
    $region7: #{residual_block_forward.1} parent=1 // pred_check_branch
      %21 = sbr.rel (0) target = $region9
    $region8: #{residual_block_forward.1} parent=1 // pred_region
      _
    $region9: #{residual_block_forward.1} parent=1 // pred_fallthru
      _
    // Predicated region
    $region10: #{residual_block_forward.1} parent=1 // pred_check
      _
    $region11: #{residual_block_forward.1} parent=1 // pred_check_branch
      %23 = sbr.rel (0) target = $region13
    $region12: #{residual_block_forward.1} parent=1 // pred_region
      %s25 = ssub.s32 6144, 6144
      %26 = vsyncadd [#allocation3], %s25
      %s27 = sshll.u32 [#allocation2], 4
      %s28 = int_to_ptr.vmem [resolvable:$true] %s27
      %33 = dma.hbm_to_vmem [thread:$0]  %s2, 6144, %s28, [#allocation3], 128, 128, 8
    $region13: #{residual_block_forward.1} parent=1 // pred_fallthru
      _
    // Predicated region
    $region14: #{residual_block_forward.1} parent=1 // pred_check
      _
    $region15: #{residual_block_forward.1} parent=1 // pred_check_branch
      %35 = sbr.rel (0) target = $region17
    $region16: #{residual_block_forward.1} parent=1 // pred_region
      %s37 = ssub.s32 2048, 2048
      %38 = vsyncadd [#allocation5], %s37
      %s39 = sshll.u32 [#allocation4], 4
      %s40 = int_to_ptr.vmem [resolvable:$true] %s39
      %45 = dma.hbm_to_vmem [thread:$0]  %s3, 2048, %s40, [#allocation5], 128, 128, 8
    $region17: #{residual_block_forward.1} parent=1 // pred_fallthru
      _
    // Predicated region
    $region18: #{residual_block_forward.1} parent=1 // pred_check
      _
    $region19: #{residual_block_forward.1} parent=1 // pred_check_branch
      %47 = sbr.rel (0) target = $region21
    $region20: #{residual_block_forward.1} parent=1 // pred_region
      _
    $region21: #{residual_block_forward.1} parent=1 // pred_fallthru
      _
    // Predicated region
    $region22: #{residual_block_forward.1} parent=1 // pred_check
      _
    $region23: #{residual_block_forward.1} parent=1 // pred_check_branch
      %49 = sbr.rel (0) target = $region25
    $region24: #{residual_block_forward.1} parent=1 // pred_region
      _
    $region25: #{residual_block_forward.1} parent=1 // pred_fallthru
      _
    // Predicated region
    $region26: #{residual_block_forward.1} parent=1 // pred_check
      _
    $region27: #{residual_block_forward.1} parent=1 // pred_check_branch
      %51 = sbr.rel (0) target = $region29
    $region28: #{residual_block_forward.1} parent=1 // pred_region
      _
    $region29: #{residual_block_forward.1} parent=1 // pred_fallthru
      _
    // Predicated region
    $region30: #{residual_block_forward.1} parent=1 // pred_check
      _
    $region31: #{residual_block_forward.1} parent=1 // pred_check_branch
      %53 = sbr.rel (0) target = $region33
    $region32: #{residual_block_forward.1} parent=1 // pred_region
      %s55 = ssub.s32 4096, 4096
      %56 = vsyncadd [#allocation5], %s55
      %s57 = sshll.u32 [#allocation6], 4
      %s58 = int_to_ptr.vmem [resolvable:$true] %s57
      %63 = dma.hbm_to_vmem [thread:$0]  %s7, 4096, %s58, [#allocation5], 256, 256, 16
    $region33: #{residual_block_forward.1} parent=1 // pred_fallthru
      _
    // Predicated region
    $region34: #{residual_block_forward.1} parent=1 // pred_check
      _
    $region35: #{residual_block_forward.1} parent=1 // pred_check_branch
      %65 = sbr.rel (0) target = $region37
    $region36: #{residual_block_forward.1} parent=1 // pred_region
      _
    $region37: #{residual_block_forward.1} parent=1 // pred_fallthru
      _
    // Predicated region
    $region38: #{residual_block_forward.1} parent=1 // pred_check
      _
    $region39: #{residual_block_forward.1} parent=1 // pred_check_branch
      %67 = sbr.rel (0) target = $region41
    $region40: #{residual_block_forward.1} parent=1 // pred_region
      %s69 = ssub.s32 4096, 4096
      %70 = vsyncadd [#allocation8], %s69
      %s71 = sshll.u32 [#allocation7], 4
      %s72 = int_to_ptr.vmem [resolvable:$true] %s71
      %77 = dma.hbm_to_vmem [thread:$0]  %s9, 4096, %s72, [#allocation8], 128, 128, 8
    $region41: #{residual_block_forward.1} parent=1 // pred_fallthru
      _
    // Predicated region
    $region42: #{residual_block_forward.1} parent=1 // pred_check
      _
    $region43: #{residual_block_forward.1} parent=1 // pred_check_branch
      %79 = sbr.rel (0) target = $region45
    $region44: #{residual_block_forward.1} parent=1 // pred_region
      %80 = dma.done [#allocation3], 6144
    $region45: #{residual_block_forward.1} parent=1 // pred_fallthru
      _
    // Predicated region
    $region46: #{residual_block_forward.1} parent=1 // pred_check
      _
    $region47: #{residual_block_forward.1} parent=1 // pred_check_branch
      %82 = sbr.rel (0) target = $region49
    $region48: #{residual_block_forward.1} parent=1 // pred_region
      %83 = dma.done [#allocation5], 2048
    $region49: #{residual_block_forward.1} parent=1 // pred_fallthru
      _
    // Predicated region
    $region50: #{residual_block_forward.1} parent=1 // pred_check
      _
    $region51: #{residual_block_forward.1} parent=1 // pred_check_branch
      %85 = sbr.rel (0) target = $region53
    $region52: #{residual_block_forward.1} parent=1 // pred_region
      %86 = dma.done [#allocation5], 4096
    $region53: #{residual_block_forward.1} parent=1 // pred_fallthru
      _
    // Predicated region
    $region54: #{residual_block_forward.1} parent=1 // pred_check
      _
    $region55: #{residual_block_forward.1} parent=1 // pred_check_branch
      %88 = sbr.rel (0) target = $region57
    $region56: #{residual_block_forward.1} parent=1 // pred_region
      %89 = dma.done [#allocation8], 4096
    $region57: #{residual_block_forward.1} parent=1 // pred_fallthru
      _
    %v90 = vld [vmem:[%s0] sm:$0xff]
    %v91 = vld [vmem:[%s0 + $0x8] sm:$0xff]
    %v92 = vlaneseq
    %v93 = vshrl.u32 %v92, 7
    %v94 = vadd.s32 %v93, 8
    %vm95 = vcmp.ne.s32.totalorder %v93, 0
    %vm96 = vcmp.ne.s32.totalorder %v94, 0
    %vm97 = vcmp.ne.s32.totalorder %v93, 15
    %vm98 = vcmp.ne.s32.totalorder %v94, 15
    %v99 = vrot.slane %v90, 7
    %v100 = vrot.slane %v91, 7
    %vm101 = vcmp.lt.s32.totalorder %v93, 1
    %v102 = vsel %vm101, %v99, %v100
    %v103 = vsel %vm101, %v100, %v99
    %v104 = vsel %vm95, %v103, 0.0
    %v105 = vsel %vm96, %v102, 0.0
    %v106 = vrot.slane %v90, 1
    %v107 = vrot.slane %v91, 1
    %vm108 = vcmp.lt.s32.totalorder %v93, 7
    %v109 = vsel %vm108, %v106, %v107
    %v110 = vsel %vm108, %v107, %v106
    %v111 = vsel %vm97, %v109, 0.0
    %v112 = vsel %vm98, %v110, 0.0
    %v113 = vld [vmem:[%s1] sm:$0xff]
    %v114 = vld [vmem:[%s1 + $0x8] sm:$0xff]
    %v115 = vld [vmem:[%s1 + $0x10] sm:$0xff]
    %v116 = vld [vmem:[%s1 + $0x18] sm:$0xff]
    %v117 = vld [vmem:[%s1 + $0x20] sm:$0xff]
    %v118 = vld [vmem:[%s1 + $0x28] sm:$0xff]
    %v119 = vld [vmem:[%s1 + $0x30] sm:$0xff]
    %v120 = vld [vmem:[%s1 + $0x38] sm:$0xff]
    %v121 = vld [vmem:[%s1 + $0x40] sm:$0xff]
    %v122 = vld [vmem:[%s1 + $0x48] sm:$0xff]
    %v123 = vld [vmem:[%s1 + $0x50] sm:$0xff]
    %v124 = vld [vmem:[%s1 + $0x58] sm:$0xff]
    %v125 = vld [vmem:[%s1 + $0x60] sm:$0xff]
    %v126 = vld [vmem:[%s1 + $0x68] sm:$0xff]
    %v127 = vld [vmem:[%s1 + $0x70] sm:$0xff]
    %v128 = vld [vmem:[%s1 + $0x78] sm:$0xff]
    %s129 = scalar_lea.vmem %s1, 128
    %v130 = vld [vmem:[%s129] sm:$0xff]
    %v131 = vld [vmem:[%s129 + $0x8] sm:$0xff]
    %v132 = vld [vmem:[%s129 + $0x10] sm:$0xff]
    %v133 = vld [vmem:[%s129 + $0x18] sm:$0xff]
    %v134 = vld [vmem:[%s129 + $0x20] sm:$0xff]
    %v135 = vld [vmem:[%s129 + $0x28] sm:$0xff]
    %v136 = vld [vmem:[%s129 + $0x30] sm:$0xff]
    %v137 = vld [vmem:[%s129 + $0x38] sm:$0xff]
    %v138 = vld [vmem:[%s129 + $0x40] sm:$0xff]
    %v139 = vld [vmem:[%s129 + $0x48] sm:$0xff]
    %v140 = vld [vmem:[%s129 + $0x50] sm:$0xff]
    %v141 = vld [vmem:[%s129 + $0x58] sm:$0xff]
    %v142 = vld [vmem:[%s129 + $0x60] sm:$0xff]
    %v143 = vld [vmem:[%s129 + $0x68] sm:$0xff]
    %v144 = vld [vmem:[%s129 + $0x70] sm:$0xff]
    %v145 = vld [vmem:[%s129 + $0x78] sm:$0xff]
    %146 = vmatprep.subr.mxu0 0.0
    %147 = vmatpush1.msra.mxu0 %v130
    %148 = vmatprep.subr.mxu0 0.0
    %149 = vmatpush1.msra.mxu0 %v131
    %150 = vmatprep.subr.mxu0 0.0
    %151 = vmatpush1.msra.mxu0 %v132
    %152 = vmatprep.subr.mxu0 0.0
    %153 = vmatpush1.msra.mxu0 %v133
    %154 = vmatprep.subr.mxu0 0.0
    %155 = vmatpush1.msra.mxu0 %v134
    %156 = vmatprep.subr.mxu0 0.0
    %157 = vmatpush1.msra.mxu0 %v135
    %158 = vmatprep.subr.mxu0 0.0
    %159 = vmatpush1.msra.mxu0 %v136
    %160 = vmatprep.subr.mxu0 0.0
    %161 = vmatpush1.msra.mxu0 %v137
    %162 = vmatprep.subr.mxu0 0.0
    %163 = vmatpush1.msra.mxu0 %v138
    %164 = vmatprep.subr.mxu0 0.0
    %165 = vmatpush1.msra.mxu0 %v139
    %166 = vmatprep.subr.mxu0 0.0
    %167 = vmatpush1.msra.mxu0 %v140
    %168 = vmatprep.subr.mxu0 0.0
    %169 = vmatpush1.msra.mxu0 %v141
    %170 = vmatprep.subr.mxu0 0.0
    %171 = vmatpush1.msra.mxu0 %v142
    %172 = vmatprep.subr.mxu0 0.0
    %173 = vmatpush1.msra.mxu0 %v143
    %174 = vmatprep.subr.mxu0 0.0
    %175 = vmatpush1.msra.mxu0 %v144
    %176 = vmatprep.subr.mxu0 0.0
    %177 = vmatpush1.msra.mxu0 %v145
    %178 = vmatprep.subr.mxu0 0.0
    %179 = vmatpush1.msra.mxu0 0.0
    %180 = vmatprep.subr.mxu0 0.0
    %181 = vmatpush1.msra.mxu0 0.0
    %182 = vmatprep.subr.mxu0 0.0
    %183 = vmatpush1.msra.mxu0 0.0
    %184 = vmatprep.subr.mxu0 0.0
    %185 = vmatpush1.msra.mxu0 0.0
    %186 = vmatprep.subr.mxu0 0.0
    %187 = vmatpush1.msra.mxu0 0.0
    %188 = vmatprep.subr.mxu0 0.0
    %189 = vmatpush1.msra.mxu0 0.0
    %190 = vmatprep.subr.mxu0 0.0
    %191 = vmatpush1.msra.mxu0 0.0
    %192 = vmatprep.subr.mxu0 0.0
    %193 = vmatpush1.msra.mxu0 0.0
    %194 = vmatprep.subr.mxu0 0.0
    %195 = vmatpush1.msra.mxu0 0.0
    %196 = vmatprep.subr.mxu0 0.0
    %197 = vmatpush1.msra.mxu0 0.0
    %198 = vmatprep.subr.mxu0 0.0
    %199 = vmatpush1.msra.mxu0 0.0
    %200 = vmatprep.subr.mxu0 0.0
    %201 = vmatpush1.msra.mxu0 0.0
    %202 = vmatprep.subr.mxu0 0.0
    %203 = vmatpush1.msra.mxu0 0.0
    %204 = vmatprep.subr.mxu0 0.0
    %205 = vmatpush1.msra.mxu0 0.0
    %206 = vmatprep.subr.mxu0 0.0
    %207 = vmatpush1.msra.mxu0 0.0
    %208 = vmatprep.subr.mxu0 0.0
    %209 = vmatpush1.msra.mxu0 0.0
    %210 = vmatprep.mubr.f32.mxu0 0.0
    %211 = vmatmul.mubr.f32.gmra.mrb[0].mxu0 %v90
    %v212 = vpop.f32.mrb[0].mxu0
    %v213 = vadd.f32 0.0, %v212
    %v214 = vpop.f32.mrb[0].mxu0
    %215 = vmatprep.mubr.f32.mxu0 0.0
    %216 = vmatmul.mubr.f32.gmra.mrb[0].mxu0 %v91
    %v217 = vpop.f32.mrb[0].mxu0
    %v218 = vadd.f32 0.0, %v217
    %v219 = vpop.f32.mrb[0].mxu0
    %220 = vdwg.mxu0
    %221 = vmatprep.subr.mxu0 0.0
    %222 = vmatpush1.msra.mxu0 %v113
    %223 = vmatprep.subr.mxu0 0.0
    %224 = vmatpush1.msra.mxu0 %v114
    %225 = vmatprep.subr.mxu0 0.0
    %226 = vmatpush1.msra.mxu0 %v115
    %227 = vmatprep.subr.mxu0 0.0
    %228 = vmatpush1.msra.mxu0 %v116
    %229 = vmatprep.subr.mxu0 0.0
    %230 = vmatpush1.msra.mxu0 %v117
    %231 = vmatprep.subr.mxu0 0.0
    %232 = vmatpush1.msra.mxu0 %v118
    %233 = vmatprep.subr.mxu0 0.0
    %234 = vmatpush1.msra.mxu0 %v119
    %235 = vmatprep.subr.mxu0 0.0
    %236 = vmatpush1.msra.mxu0 %v120
    %237 = vmatprep.subr.mxu0 0.0
    %238 = vmatpush1.msra.mxu0 %v121
    %239 = vmatprep.subr.mxu0 0.0
    %240 = vmatpush1.msra.mxu0 %v122
    %241 = vmatprep.subr.mxu0 0.0
    %242 = vmatpush1.msra.mxu0 %v123
    %243 = vmatprep.subr.mxu0 0.0
    %244 = vmatpush1.msra.mxu0 %v124
    %245 = vmatprep.subr.mxu0 0.0
    %246 = vmatpush1.msra.mxu0 %v125
    %247 = vmatprep.subr.mxu0 0.0
    %248 = vmatpush1.msra.mxu0 %v126
    %249 = vmatprep.subr.mxu0 0.0
    %250 = vmatpush1.msra.mxu0 %v127
    %251 = vmatprep.subr.mxu0 0.0
    %252 = vmatpush1.msra.mxu0 %v128
    %253 = vmatprep.subr.mxu0 0.0
    %254 = vmatpush1.msra.mxu0 0.0
    %255 = vmatprep.subr.mxu0 0.0
    %256 = vmatpush1.msra.mxu0 0.0
    %257 = vmatprep.subr.mxu0 0.0
    %258 = vmatpush1.msra.mxu0 0.0
    %259 = vmatprep.subr.mxu0 0.0
    %260 = vmatpush1.msra.mxu0 0.0
    %261 = vmatprep.subr.mxu0 0.0
    %262 = vmatpush1.msra.mxu0 0.0
    %263 = vmatprep.subr.mxu0 0.0
    %264 = vmatpush1.msra.mxu0 0.0
    %265 = vmatprep.subr.mxu0 0.0
    %266 = vmatpush1.msra.mxu0 0.0
    %267 = vmatprep.subr.mxu0 0.0
    %268 = vmatpush1.msra.mxu0 0.0
    %269 = vmatprep.subr.mxu0 0.0
    %270 = vmatpush1.msra.mxu0 0.0
    %271 = vmatprep.subr.mxu0 0.0
    %272 = vmatpush1.msra.mxu0 0.0
    %273 = vmatprep.subr.mxu0 0.0
    %274 = vmatpush1.msra.mxu0 0.0
    %275 = vmatprep.subr.mxu0 0.0
    %276 = vmatpush1.msra.mxu0 0.0
    %277 = vmatprep.subr.mxu0 0.0
    %278 = vmatpush1.msra.mxu0 0.0
    %279 = vmatprep.subr.mxu0 0.0
    %280 = vmatpush1.msra.mxu0 0.0
    %281 = vmatprep.subr.mxu0 0.0
    %282 = vmatpush1.msra.mxu0 0.0
    %283 = vmatprep.subr.mxu0 0.0
    %284 = vmatpush1.msra.mxu0 0.0
    %285 = vmatprep.mubr.f32.mxu0 0.0
    %286 = vmatmul.mubr.f32.gmra.mrb[0].mxu0 %v104
    %v287 = vpop.f32.mrb[0].mxu0
    %v288 = vadd.f32 %v213, %v287
    %v289 = vpop.f32.mrb[0].mxu0
    %290 = vmatprep.mubr.f32.mxu0 0.0
    %291 = vmatmul.mubr.f32.gmra.mrb[0].mxu0 %v105
    %v292 = vpop.f32.mrb[0].mxu0
    %v293 = vadd.f32 %v218, %v292
    %v294 = vpop.f32.mrb[0].mxu0
    %295 = vdwg.mxu0
    %s296 = scalar_lea.vmem %s1, 256
    %v297 = vld [vmem:[%s296] sm:$0xff]
    %v298 = vld [vmem:[%s296 + $0x8] sm:$0xff]
    %v299 = vld [vmem:[%s296 + $0x10] sm:$0xff]
    %v300 = vld [vmem:[%s296 + $0x18] sm:$0xff]
    %v301 = vld [vmem:[%s296 + $0x20] sm:$0xff]
    %v302 = vld [vmem:[%s296 + $0x28] sm:$0xff]
    %v303 = vld [vmem:[%s296 + $0x30] sm:$0xff]
    %v304 = vld [vmem:[%s296 + $0x38] sm:$0xff]
    %v305 = vld [vmem:[%s296 + $0x40] sm:$0xff]
    %v306 = vld [vmem:[%s296 + $0x48] sm:$0xff]
    %v307 = vld [vmem:[%s296 + $0x50] sm:$0xff]
    %v308 = vld [vmem:[%s296 + $0x58] sm:$0xff]
    %v309 = vld [vmem:[%s296 + $0x60] sm:$0xff]
    %v310 = vld [vmem:[%s296 + $0x68] sm:$0xff]
    %v311 = vld [vmem:[%s296 + $0x70] sm:$0xff]
    %v312 = vld [vmem:[%s296 + $0x78] sm:$0xff]
    %313 = vmatprep.subr.mxu0 0.0
    %314 = vmatpush1.msra.mxu0 %v297
    %315 = vmatprep.subr.mxu0 0.0
    %316 = vmatpush1.msra.mxu0 %v298
    %317 = vmatprep.subr.mxu0 0.0
    %318 = vmatpush1.msra.mxu0 %v299
    %319 = vmatprep.subr.mxu0 0.0
    %320 = vmatpush1.msra.mxu0 %v300
    %321 = vmatprep.subr.mxu0 0.0
    %322 = vmatpush1.msra.mxu0 %v301
    %323 = vmatprep.subr.mxu0 0.0
    %324 = vmatpush1.msra.mxu0 %v302
    %325 = vmatprep.subr.mxu0 0.0
    %326 = vmatpush1.msra.mxu0 %v303
    %327 = vmatprep.subr.mxu0 0.0
    %328 = vmatpush1.msra.mxu0 %v304
    %329 = vmatprep.subr.mxu0 0.0
    %330 = vmatpush1.msra.mxu0 %v305
    %331 = vmatprep.subr.mxu0 0.0
    %332 = vmatpush1.msra.mxu0 %v306
    %333 = vmatprep.subr.mxu0 0.0
    %334 = vmatpush1.msra.mxu0 %v307
    %335 = vmatprep.subr.mxu0 0.0
    %336 = vmatpush1.msra.mxu0 %v308
    %337 = vmatprep.subr.mxu0 0.0
    %338 = vmatpush1.msra.mxu0 %v309
    %339 = vmatprep.subr.mxu0 0.0
    %340 = vmatpush1.msra.mxu0 %v310
    %341 = vmatprep.subr.mxu0 0.0
    %342 = vmatpush1.msra.mxu0 %v311
    %343 = vmatprep.subr.mxu0 0.0
    %344 = vmatpush1.msra.mxu0 %v312
    %345 = vmatprep.subr.mxu0 0.0
    %346 = vmatpush1.msra.mxu0 0.0
    %347 = vmatprep.subr.mxu0 0.0
    %348 = vmatpush1.msra.mxu0 0.0
    %349 = vmatprep.subr.mxu0 0.0
    %350 = vmatpush1.msra.mxu0 0.0
    %351 = vmatprep.subr.mxu0 0.0
    %352 = vmatpush1.msra.mxu0 0.0
    %353 = vmatprep.subr.mxu0 0.0
    %354 = vmatpush1.msra.mxu0 0.0
    %355 = vmatprep.subr.mxu0 0.0
    %356 = vmatpush1.msra.mxu0 0.0
    %357 = vmatprep.subr.mxu0 0.0
    %358 = vmatpush1.msra.mxu0 0.0
    %359 = vmatprep.subr.mxu0 0.0
    %360 = vmatpush1.msra.mxu0 0.0
    %361 = vmatprep.subr.mxu0 0.0
    %362 = vmatpush1.msra.mxu0 0.0
    %363 = vmatprep.subr.mxu0 0.0
    %364 = vmatpush1.msra.mxu0 0.0
    %365 = vmatprep.subr.mxu0 0.0
    %366 = vmatpush1.msra.mxu0 0.0
    %367 = vmatprep.subr.mxu0 0.0
    %368 = vmatpush1.msra.mxu0 0.0
    %369 = vmatprep.subr.mxu0 0.0
    %370 = vmatpush1.msra.mxu0 0.0
    %371 = vmatprep.subr.mxu0 0.0
    %372 = vmatpush1.msra.mxu0 0.0
    %373 = vmatprep.subr.mxu0 0.0
    %374 = vmatpush1.msra.mxu0 0.0
    %375 = vmatprep.subr.mxu0 0.0
    %376 = vmatpush1.msra.mxu0 0.0
    %377 = vmatprep.mubr.f32.mxu0 0.0
    %378 = vmatmul.mubr.f32.gmra.mrb[0].mxu0 %v111
    %v379 = vpop.f32.mrb[0].mxu0
    %v380 = vadd.f32 0.0, %v379
    %v381 = vpop.f32.mrb[0].mxu0
    %382 = vmatprep.mubr.f32.mxu0 0.0
    %383 = vmatmul.mubr.f32.gmra.mrb[0].mxu0 %v112
    %v384 = vpop.f32.mrb[0].mxu0
    %v385 = vadd.f32 0.0, %v384
    %v386 = vpop.f32.mrb[0].mxu0
    %387 = vdwg.mxu0
    %v388 = vadd.f32 %v288, %v380
    %v389 = vadd.f32 %v293, %v385
    %v390 = vadd.f32 %v388, %v389
    %v391 = vrot.slane %v390, 4
    %v392 = vadd.f32 %v390, %v391
    %v393 = vrot.slane %v392, 2
    %v394 = vadd.f32 %v392, %v393
    %v395 = vrot.slane %v394, 1
    %v396 = vadd.f32 %v394, %v395
    %v397 = vld [vmem:[#allocation4] sm:$0xff]
    %v398 = vld [vmem:[#allocation4 + $0x8] sm:$0xff]
    %v399 = vld [vmem:[#allocation4 + $0x10] sm:$0xff]
    %v400 = vld [vmem:[#allocation4 + $0x18] sm:$0xff]
    %v401 = vld [vmem:[#allocation4 + $0x20] sm:$0xff]
    %v402 = vld [vmem:[#allocation4 + $0x28] sm:$0xff]
    %v403 = vld [vmem:[#allocation4 + $0x30] sm:$0xff]
    %v404 = vld [vmem:[#allocation4 + $0x38] sm:$0xff]
    %v405 = vld [vmem:[#allocation4 + $0x40] sm:$0xff]
    %v406 = vld [vmem:[#allocation4 + $0x48] sm:$0xff]
    %v407 = vld [vmem:[#allocation4 + $0x50] sm:$0xff]
    %v408 = vld [vmem:[#allocation4 + $0x58] sm:$0xff]
    %v409 = vld [vmem:[#allocation4 + $0x60] sm:$0xff]
    %v410 = vld [vmem:[#allocation4 + $0x68] sm:$0xff]
    %v411 = vld [vmem:[#allocation4 + $0x70] sm:$0xff]
    %v412 = vld [vmem:[#allocation4 + $0x78] sm:$0xff]
    %413 = vmatprep.subr.mxu0 0.0
    %414 = vmatpush1.msra.mxu0 %v397
    %415 = vmatprep.subr.mxu0 0.0
    %416 = vmatpush1.msra.mxu0 %v398
    %417 = vmatprep.subr.mxu0 0.0
    %418 = vmatpush1.msra.mxu0 %v399
    %419 = vmatprep.subr.mxu0 0.0
    %420 = vmatpush1.msra.mxu0 %v400
    %421 = vmatprep.subr.mxu0 0.0
    %422 = vmatpush1.msra.mxu0 %v401
    %423 = vmatprep.subr.mxu0 0.0
    %424 = vmatpush1.msra.mxu0 %v402
    %425 = vmatprep.subr.mxu0 0.0
    %426 = vmatpush1.msra.mxu0 %v403
    %427 = vmatprep.subr.mxu0 0.0
    %428 = vmatpush1.msra.mxu0 %v404
    %429 = vmatprep.subr.mxu0 0.0
    %430 = vmatpush1.msra.mxu0 %v405
    %431 = vmatprep.subr.mxu0 0.0
    %432 = vmatpush1.msra.mxu0 %v406
    %433 = vmatprep.subr.mxu0 0.0
    %434 = vmatpush1.msra.mxu0 %v407
    %435 = vmatprep.subr.mxu0 0.0
    %436 = vmatpush1.msra.mxu0 %v408
    %437 = vmatprep.subr.mxu0 0.0
    %438 = vmatpush1.msra.mxu0 %v409
    %439 = vmatprep.subr.mxu0 0.0
    %440 = vmatpush1.msra.mxu0 %v410
    %441 = vmatprep.subr.mxu0 0.0
    %442 = vmatpush1.msra.mxu0 %v411
    %443 = vmatprep.subr.mxu0 0.0
    %444 = vmatpush1.msra.mxu0 %v412
    %445 = vmatprep.subr.mxu0 0.0
    %446 = vmatpush1.msra.mxu0 0.0
    %447 = vmatprep.subr.mxu0 0.0
    %448 = vmatpush1.msra.mxu0 0.0
    %449 = vmatprep.subr.mxu0 0.0
    %450 = vmatpush1.msra.mxu0 0.0
    %451 = vmatprep.subr.mxu0 0.0
    %452 = vmatpush1.msra.mxu0 0.0
    %453 = vmatprep.subr.mxu0 0.0
    %454 = vmatpush1.msra.mxu0 0.0
    %455 = vmatprep.subr.mxu0 0.0
    %456 = vmatpush1.msra.mxu0 0.0
    %457 = vmatprep.subr.mxu0 0.0
    %458 = vmatpush1.msra.mxu0 0.0
    %459 = vmatprep.subr.mxu0 0.0
    %460 = vmatpush1.msra.mxu0 0.0
    %461 = vmatprep.subr.mxu0 0.0
    %462 = vmatpush1.msra.mxu0 0.0
    %463 = vmatprep.subr.mxu0 0.0
    %464 = vmatpush1.msra.mxu0 0.0
    %465 = vmatprep.subr.mxu0 0.0
    %466 = vmatpush1.msra.mxu0 0.0
    %467 = vmatprep.subr.mxu0 0.0
    %468 = vmatpush1.msra.mxu0 0.0
    %469 = vmatprep.subr.mxu0 0.0
    %470 = vmatpush1.msra.mxu0 0.0
    %471 = vmatprep.subr.mxu0 0.0
    %472 = vmatpush1.msra.mxu0 0.0
    %473 = vmatprep.subr.mxu0 0.0
    %474 = vmatpush1.msra.mxu0 0.0
    %475 = vmatprep.subr.mxu0 0.0
    %476 = vmatpush1.msra.mxu0 0.0
    %477 = vmatprep.mubr.f32.mxu0 0.0
    %478 = vmatmul.mubr.f32.gmra.mrb[0].mxu0 %v396
    %v479 = vpop.f32.mrb[0].mxu0
    %v480 = vadd.f32 0.0, %v479
    %v481 = vpop.f32.mrb[0].mxu0
    %482 = vdwg.mxu0
    %v483 = vmul.f32 %v480, 0.001953125
    %v484 = vlaneseq
    %v485 = vshrl.u32 %v484, 7
    %v486 = vsub.s32 0, %v485
    %v487 = vrot.slane %v483, %v486
    %v488 = vsub.f32 %v388, %v487
    %v489 = vsub.f32 %v389, %v487
    %v490 = vmul.f32 %v488, %v488
    %v491 = vmul.f32 %v489, %v489
    %v492 = vadd.f32 %v490, %v491
    %v493 = vrot.slane %v492, 4
    %v494 = vadd.f32 %v492, %v493
    %v495 = vrot.slane %v494, 2
    %v496 = vadd.f32 %v494, %v495
    %v497 = vrot.slane %v496, 1
    %v498 = vadd.f32 %v496, %v497
    %499 = vmatprep.subr.mxu0 0.0
    %500 = vmatpush1.msra.mxu0 %v397
    %501 = vmatprep.subr.mxu0 0.0
    %502 = vmatpush1.msra.mxu0 %v398
    %503 = vmatprep.subr.mxu0 0.0
    %504 = vmatpush1.msra.mxu0 %v399
    %505 = vmatprep.subr.mxu0 0.0
    %506 = vmatpush1.msra.mxu0 %v400
    %507 = vmatprep.subr.mxu0 0.0
    %508 = vmatpush1.msra.mxu0 %v401
    %509 = vmatprep.subr.mxu0 0.0
    %510 = vmatpush1.msra.mxu0 %v402
    %511 = vmatprep.subr.mxu0 0.0
    %512 = vmatpush1.msra.mxu0 %v403
    %513 = vmatprep.subr.mxu0 0.0
    %514 = vmatpush1.msra.mxu0 %v404
    %515 = vmatprep.subr.mxu0 0.0
    %516 = vmatpush1.msra.mxu0 %v405
    %517 = vmatprep.subr.mxu0 0.0
    %518 = vmatpush1.msra.mxu0 %v406
    %519 = vmatprep.subr.mxu0 0.0
    %520 = vmatpush1.msra.mxu0 %v407
    %521 = vmatprep.subr.mxu0 0.0
    %522 = vmatpush1.msra.mxu0 %v408
    %523 = vmatprep.subr.mxu0 0.0
    %524 = vmatpush1.msra.mxu0 %v409
    %525 = vmatprep.subr.mxu0 0.0
    %526 = vmatpush1.msra.mxu0 %v410
    %527 = vmatprep.subr.mxu0 0.0
    %528 = vmatpush1.msra.mxu0 %v411
    %529 = vmatprep.subr.mxu0 0.0
    %530 = vmatpush1.msra.mxu0 %v412
    %531 = vmatprep.subr.mxu0 0.0
    %532 = vmatpush1.msra.mxu0 0.0
    %533 = vmatprep.subr.mxu0 0.0
    %534 = vmatpush1.msra.mxu0 0.0
    %535 = vmatprep.subr.mxu0 0.0
    %536 = vmatpush1.msra.mxu0 0.0
    %537 = vmatprep.subr.mxu0 0.0
    %538 = vmatpush1.msra.mxu0 0.0
    %539 = vmatprep.subr.mxu0 0.0
    %540 = vmatpush1.msra.mxu0 0.0
    %541 = vmatprep.subr.mxu0 0.0
    %542 = vmatpush1.msra.mxu0 0.0
    %543 = vmatprep.subr.mxu0 0.0
    %544 = vmatpush1.msra.mxu0 0.0
    %545 = vmatprep.subr.mxu0 0.0
    %546 = vmatpush1.msra.mxu0 0.0
    %547 = vmatprep.subr.mxu0 0.0
    %548 = vmatpush1.msra.mxu0 0.0
    %549 = vmatprep.subr.mxu0 0.0
    %550 = vmatpush1.msra.mxu0 0.0
    %551 = vmatprep.subr.mxu0 0.0
    %552 = vmatpush1.msra.mxu0 0.0
    %553 = vmatprep.subr.mxu0 0.0
    %554 = vmatpush1.msra.mxu0 0.0
    %555 = vmatprep.subr.mxu0 0.0
    %556 = vmatpush1.msra.mxu0 0.0
    %557 = vmatprep.subr.mxu0 0.0
    %558 = vmatpush1.msra.mxu0 0.0
    %559 = vmatprep.subr.mxu0 0.0
    %560 = vmatpush1.msra.mxu0 0.0
    %561 = vmatprep.subr.mxu0 0.0
    %562 = vmatpush1.msra.mxu0 0.0
    %563 = vmatprep.mubr.f32.mxu0 0.0
    %564 = vmatmul.mubr.f32.gmra.mrb[0].mxu0 %v498
    %v565 = vpop.f32.mrb[0].mxu0
    %v566 = vadd.f32 0.0, %v565
    %v567 = vpop.f32.mrb[0].mxu0
    %568 = vdwg.mxu0
    %v569 = vmul.f32 %v566, 0.001953125
    %v570 = vld [vmem:[%s4] sm:$0x3]
    %v571 = vadd.f32 %v569, 1e-05
    %v572 = vrsqrt.pop %v571
    %v573 = vmul.f32 %v570, %v572
    %v574 = vlaneseq
    %v575 = vshrl.u32 %v574, 7
    %v576 = vsub.s32 0, %v575
    %v577 = vrot.slane %v573, %v576
    %v578 = vmul.f32 %v488, %v577
    %v579 = vmul.f32 %v489, %v577
    %v580 = vlaneseq
    %v581 = vshrl.u32 %v580, 7
    %v582 = vsub.s32 1, %v581
    %v583 = vrot.slane %v570, %v582
    %v584 = vadd.f32 %v578, %v583
    %v585 = vadd.f32 %v579, %v583
    %v586 = vld [vmem:[%s6] sm:$0xff]
    %v587 = vld [vmem:[%s6 + $0x8] sm:$0xff]
    %v588 = vld [vmem:[%s6 + $0x10] sm:$0xff]
    %v589 = vld [vmem:[%s6 + $0x18] sm:$0xff]
    %vm590 = vcmask 130048
    %v592 = vsel %vm590, %v586, 0
    %v595 = vsel %vm590, %v587, 0
    %v598 = vsel %vm590, %v588, 0
    %v601 = vsel %vm590, %v589, 0
    %603 = vmatprep.subr.mxu0 0.0
    %604 = vmatpush1.msra.mxu0 %v584
    %605 = vmatprep.subr.mxu0 0.0
    %606 = vmatpush1.msra.mxu0 %v585
    %607 = vmatprep.subr.mxu0 0.0
    %608 = vmatpush1.msra.mxu0 0.0
    %609 = vmatprep.subr.mxu0 0.0
    %610 = vmatpush1.msra.mxu0 0.0
    %611 = vmatprep.subr.mxu0 0.0
    %612 = vmatpush1.msra.mxu0 0.0
    %613 = vmatprep.subr.mxu0 0.0
    %614 = vmatpush1.msra.mxu0 0.0
    %615 = vmatprep.subr.mxu0 0.0
    %616 = vmatpush1.msra.mxu0 0.0
    %617 = vmatprep.subr.mxu0 0.0
    %618 = vmatpush1.msra.mxu0 0.0
    %619 = vmatprep.subr.mxu0 0.0
    %620 = vmatpush1.msra.mxu0 0.0
    %621 = vmatprep.subr.mxu0 0.0
    %622 = vmatpush1.msra.mxu0 0.0
    %623 = vmatprep.subr.mxu0 0.0
    %624 = vmatpush1.msra.mxu0 0.0
    %625 = vmatprep.subr.mxu0 0.0
    %626 = vmatpush1.msra.mxu0 0.0
    %627 = vmatprep.subr.mxu0 0.0
    %628 = vmatpush1.msra.mxu0 0.0
    %629 = vmatprep.subr.mxu0 0.0
    %630 = vmatpush1.msra.mxu0 0.0
    %631 = vmatprep.subr.mxu0 0.0
    %632 = vmatpush1.msra.mxu0 0.0
    %633 = vmatprep.subr.mxu0 0.0
    %634 = vmatpush1.msra.mxu0 0.0
    %635 = vmatprep.subr.mxu0 0.0
    %636 = vmatpush1.msra.mxu0 0.0
    %637 = vmatprep.subr.mxu0 0.0
    %638 = vmatpush1.msra.mxu0 0.0
    %639 = vmatprep.subr.mxu0 0.0
    %640 = vmatpush1.msra.mxu0 0.0
    %641 = vmatprep.subr.mxu0 0.0
    %642 = vmatpush1.msra.mxu0 0.0
    %643 = vmatprep.subr.mxu0 0.0
    %644 = vmatpush1.msra.mxu0 0.0
    %645 = vmatprep.subr.mxu0 0.0
    %646 = vmatpush1.msra.mxu0 0.0
    %647 = vmatprep.subr.mxu0 0.0
    %648 = vmatpush1.msra.mxu0 0.0
    %649 = vmatprep.subr.mxu0 0.0
    %650 = vmatpush1.msra.mxu0 0.0
    %651 = vmatprep.subr.mxu0 0.0
    %652 = vmatpush1.msra.mxu0 0.0
    %653 = vmatprep.subr.mxu0 0.0
    %654 = vmatpush1.msra.mxu0 0.0
    %655 = vmatprep.subr.mxu0 0.0
    %656 = vmatpush1.msra.mxu0 0.0
    %657 = vmatprep.subr.mxu0 0.0
    %658 = vmatpush1.msra.mxu0 0.0
    %659 = vmatprep.subr.mxu0 0.0
    %660 = vmatpush1.msra.mxu0 0.0
    %661 = vmatprep.subr.mxu0 0.0
    %662 = vmatpush1.msra.mxu0 0.0
    %663 = vmatprep.subr.mxu0 0.0
    %664 = vmatpush1.msra.mxu0 0.0
    %665 = vmatprep.subr.mxu0 0.0
    %666 = vmatpush1.msra.mxu0 0.0
    %667 = vmatprep.mubr.f32.mxu0 0.0
    %668 = vmatmul.mubr.f32.gmra.mrb[0].mxu0 %v592
    %v669 = vpop.f32.mrb[0].mxu0
    %v670 = vadd.f32 0.0, %v669
    %v671 = vpop.f32.mrb[0].mxu0
    %672 = vmatprep.mubr.f32.mxu0 0.0
    %673 = vmatmul.mubr.f32.gmra.mrb[0].mxu0 %v595
    %v674 = vpop.f32.mrb[0].mxu0
    %v675 = vadd.f32 0.0, %v674
    %v676 = vpop.f32.mrb[0].mxu0
    %677 = vmatprep.mubr.f32.mxu0 0.0
    %678 = vmatmul.mubr.f32.gmra.mrb[0].mxu0 %v598
    %v679 = vpop.f32.mrb[0].mxu0
    %v680 = vadd.f32 0.0, %v679
    %v681 = vpop.f32.mrb[0].mxu0
    %682 = vmatprep.mubr.f32.mxu0 0.0
    %683 = vmatmul.mubr.f32.gmra.mrb[0].mxu0 %v601
    %v684 = vpop.f32.mrb[0].mxu0
    %v685 = vadd.f32 0.0, %v684
    %v686 = vpop.f32.mrb[0].mxu0
    %687 = vdwg.mxu0
    %v688 = vld [vmem:[#allocation6] sm:$0xff]
    %v689 = vld [vmem:[#allocation6 + $0x8] sm:$0xff]
    %v690 = vld [vmem:[#allocation6 + $0x10] sm:$0xff]
    %v691 = vld [vmem:[#allocation6 + $0x18] sm:$0xff]
    %v692 = vld [vmem:[#allocation6 + $0x20] sm:$0xff]
    %v693 = vld [vmem:[#allocation6 + $0x28] sm:$0xff]
    %v694 = vld [vmem:[#allocation6 + $0x30] sm:$0xff]
    %v695 = vld [vmem:[#allocation6 + $0x38] sm:$0xff]
    %v696 = vld [vmem:[#allocation6 + $0x40] sm:$0xff]
    %v697 = vld [vmem:[#allocation6 + $0x48] sm:$0xff]
    %v698 = vld [vmem:[#allocation6 + $0x50] sm:$0xff]
    %v699 = vld [vmem:[#allocation6 + $0x58] sm:$0xff]
    %v700 = vld [vmem:[#allocation6 + $0x60] sm:$0xff]
    %v701 = vld [vmem:[#allocation6 + $0x68] sm:$0xff]
    %v702 = vld [vmem:[#allocation6 + $0x70] sm:$0xff]
    %v703 = vld [vmem:[#allocation6 + $0x78] sm:$0xff]
    %v704 = vld [vmem:[#allocation6 + $0x80] sm:$0xff]
    %v705 = vld [vmem:[#allocation6 + $0x88] sm:$0xff]
    %v706 = vld [vmem:[#allocation6 + $0x90] sm:$0xff]
    %v707 = vld [vmem:[#allocation6 + $0x98] sm:$0xff]
    %v708 = vld [vmem:[#allocation6 + $0xa0] sm:$0xff]
    %v709 = vld [vmem:[#allocation6 + $0xa8] sm:$0xff]
    %v710 = vld [vmem:[#allocation6 + $0xb0] sm:$0xff]
    %v711 = vld [vmem:[#allocation6 + $0xb8] sm:$0xff]
    %v712 = vld [vmem:[#allocation6 + $0xc0] sm:$0xff]
    %v713 = vld [vmem:[#allocation6 + $0xc8] sm:$0xff]
    %v714 = vld [vmem:[#allocation6 + $0xd0] sm:$0xff]
    %v715 = vld [vmem:[#allocation6 + $0xd8] sm:$0xff]
    %v716 = vld [vmem:[#allocation6 + $0xe0] sm:$0xff]
    %v717 = vld [vmem:[#allocation6 + $0xe8] sm:$0xff]
    %v718 = vld [vmem:[#allocation6 + $0xf0] sm:$0xff]
    %v719 = vld [vmem:[#allocation6 + $0xf8] sm:$0xff]
    %720 = vmatprep.subr.mxu0 %v689
    %721 = vmatpush1.msra.mxu0 %v688
    %722 = vmatprep.subr.mxu0 %v691
    %723 = vmatpush1.msra.mxu0 %v690
    %724 = vmatprep.subr.mxu0 %v693
    %725 = vmatpush1.msra.mxu0 %v692
    %726 = vmatprep.subr.mxu0 %v695
    %727 = vmatpush1.msra.mxu0 %v694
    %728 = vmatprep.subr.mxu0 %v697
    %729 = vmatpush1.msra.mxu0 %v696
    %730 = vmatprep.subr.mxu0 %v699
    %731 = vmatpush1.msra.mxu0 %v698
    %732 = vmatprep.subr.mxu0 %v701
    %733 = vmatpush1.msra.mxu0 %v700
    %734 = vmatprep.subr.mxu0 %v703
    %735 = vmatpush1.msra.mxu0 %v702
    %736 = vmatprep.subr.mxu0 %v705
    %737 = vmatpush1.msra.mxu0 %v704
    %738 = vmatprep.subr.mxu0 %v707
    %739 = vmatpush1.msra.mxu0 %v706
    %740 = vmatprep.subr.mxu0 %v709
    %741 = vmatpush1.msra.mxu0 %v708
    %742 = vmatprep.subr.mxu0 %v711
    %743 = vmatpush1.msra.mxu0 %v710
    %744 = vmatprep.subr.mxu0 %v713
    %745 = vmatpush1.msra.mxu0 %v712
    %746 = vmatprep.subr.mxu0 %v715
    %747 = vmatpush1.msra.mxu0 %v714
    %748 = vmatprep.subr.mxu0 %v717
    %749 = vmatpush1.msra.mxu0 %v716
    %750 = vmatprep.subr.mxu0 %v719
    %751 = vmatpush1.msra.mxu0 %v718
    %752 = vmatprep.subr.mxu0 0.0
    %753 = vmatpush1.msra.mxu0 0.0
    %754 = vmatprep.subr.mxu0 0.0
    %755 = vmatpush1.msra.mxu0 0.0
    %756 = vmatprep.subr.mxu0 0.0
    %757 = vmatpush1.msra.mxu0 0.0
    %758 = vmatprep.subr.mxu0 0.0
    %759 = vmatpush1.msra.mxu0 0.0
    %760 = vmatprep.subr.mxu0 0.0
    %761 = vmatpush1.msra.mxu0 0.0
    %762 = vmatprep.subr.mxu0 0.0
    %763 = vmatpush1.msra.mxu0 0.0
    %764 = vmatprep.subr.mxu0 0.0
    %765 = vmatpush1.msra.mxu0 0.0
    %766 = vmatprep.subr.mxu0 0.0
    %767 = vmatpush1.msra.mxu0 0.0
    %768 = vmatprep.subr.mxu0 0.0
    %769 = vmatpush1.msra.mxu0 0.0
    %770 = vmatprep.subr.mxu0 0.0
    %771 = vmatpush1.msra.mxu0 0.0
    %772 = vmatprep.subr.mxu0 0.0
    %773 = vmatpush1.msra.mxu0 0.0
    %774 = vmatprep.subr.mxu0 0.0
    %775 = vmatpush1.msra.mxu0 0.0
    %776 = vmatprep.subr.mxu0 0.0
    %777 = vmatpush1.msra.mxu0 0.0
    %778 = vmatprep.subr.mxu0 0.0
    %779 = vmatpush1.msra.mxu0 0.0
    %780 = vmatprep.subr.mxu0 0.0
    %781 = vmatpush1.msra.mxu0 0.0
    %782 = vmatprep.subr.mxu0 0.0
    %783 = vmatpush1.msra.mxu0 0.0
    %784 = vmatprep.mubr.f32.mxu0 0.0
    %785 = vmatmul.mubr.f32.gmra.mrb[0].mxu0 %v670
    %v786 = vpop.f32.mrb[0].mxu0
    %v787 = vadd.f32 0.0, %v786
    %v788 = vpop.f32.mrb[0].mxu0
    %v789 = vadd.f32 0.0, %v788
    %790 = vmatprep.mubr.f32.mxu0 0.0
    %791 = vmatmul.mubr.f32.gmra.mrb[0].mxu0 %v675
    %v792 = vpop.f32.mrb[0].mxu0
    %v793 = vadd.f32 0.0, %v792
    %v794 = vpop.f32.mrb[0].mxu0
    %v795 = vadd.f32 0.0, %v794
    %796 = vmatprep.mubr.f32.mxu0 0.0
    %797 = vmatmul.mubr.f32.gmra.mrb[0].mxu0 %v680
    %v798 = vpop.f32.mrb[0].mxu0
    %v799 = vadd.f32 0.0, %v798
    %v800 = vpop.f32.mrb[0].mxu0
    %v801 = vadd.f32 0.0, %v800
    %802 = vmatprep.mubr.f32.mxu0 0.0
    %803 = vmatmul.mubr.f32.gmra.mrb[0].mxu0 %v685
    %v804 = vpop.f32.mrb[0].mxu0
    %v805 = vadd.f32 0.0, %v804
    %v806 = vpop.f32.mrb[0].mxu0
    %v807 = vadd.f32 0.0, %v806
    %808 = vdwg.mxu0
    %vm809 = vcmp.ge.f32.partialorder %v787, 0.0
    %vm810 = vcmp.ge.f32.partialorder %v789, 0.0
    %vm811 = vcmp.ge.f32.partialorder %v793, 0.0
    %vm812 = vcmp.ge.f32.partialorder %v795, 0.0
    %vm813 = vcmp.ge.f32.partialorder %v799, 0.0
    %vm814 = vcmp.ge.f32.partialorder %v801, 0.0
    %vm815 = vcmp.ge.f32.partialorder %v805, 0.0
    %vm816 = vcmp.ge.f32.partialorder %v807, 0.0
    %v817 = vmul.f32 %v787, 0.01
    %v818 = vmul.f32 %v789, 0.01
    %v819 = vmul.f32 %v793, 0.01
    %v820 = vmul.f32 %v795, 0.01
    %v821 = vmul.f32 %v799, 0.01
    %v822 = vmul.f32 %v801, 0.01
    %v823 = vmul.f32 %v805, 0.01
    %v824 = vmul.f32 %v807, 0.01
    %v825 = vsel %vm809, %v787, %v817
    %v826 = vsel %vm810, %v789, %v818
    %v827 = vsel %vm811, %v793, %v819
    %v828 = vsel %vm812, %v795, %v820
    %v829 = vsel %vm813, %v799, %v821
    %v830 = vsel %vm814, %v801, %v822
    %v831 = vsel %vm815, %v805, %v823
    %v832 = vsel %vm816, %v807, %v824
    %v833 = vld [vmem:[%s8] sm:$0xff]
    %v834 = vld [vmem:[%s8 + $0x8] sm:$0xff]
    %vm835 = vcmask 261120
    %v837 = vsel %vm835, %v833, 0
    %v840 = vsel %vm835, %v834, 0
    %842 = vmatprep.subr.mxu0 %v826
    %843 = vmatpush1.msra.mxu0 %v825
    %844 = vmatprep.subr.mxu0 %v828
    %845 = vmatpush1.msra.mxu0 %v827
    %846 = vmatprep.subr.mxu0 %v830
    %847 = vmatpush1.msra.mxu0 %v829
    %848 = vmatprep.subr.mxu0 %v832
    %849 = vmatpush1.msra.mxu0 %v831
    %850 = vmatprep.subr.mxu0 0.0
    %851 = vmatpush1.msra.mxu0 0.0
    %852 = vmatprep.subr.mxu0 0.0
    %853 = vmatpush1.msra.mxu0 0.0
    %854 = vmatprep.subr.mxu0 0.0
    %855 = vmatpush1.msra.mxu0 0.0
    %856 = vmatprep.subr.mxu0 0.0
    %857 = vmatpush1.msra.mxu0 0.0
    %858 = vmatprep.subr.mxu0 0.0
    %859 = vmatpush1.msra.mxu0 0.0
    %860 = vmatprep.subr.mxu0 0.0
    %861 = vmatpush1.msra.mxu0 0.0
    %862 = vmatprep.subr.mxu0 0.0
    %863 = vmatpush1.msra.mxu0 0.0
    %864 = vmatprep.subr.mxu0 0.0
    %865 = vmatpush1.msra.mxu0 0.0
    %866 = vmatprep.subr.mxu0 0.0
    %867 = vmatpush1.msra.mxu0 0.0
    %868 = vmatprep.subr.mxu0 0.0
    %869 = vmatpush1.msra.mxu0 0.0
    %870 = vmatprep.subr.mxu0 0.0
    %871 = vmatpush1.msra.mxu0 0.0
    %872 = vmatprep.subr.mxu0 0.0
    %873 = vmatpush1.msra.mxu0 0.0
    %874 = vmatprep.subr.mxu0 0.0
    %875 = vmatpush1.msra.mxu0 0.0
    %876 = vmatprep.subr.mxu0 0.0
    %877 = vmatpush1.msra.mxu0 0.0
    %878 = vmatprep.subr.mxu0 0.0
    %879 = vmatpush1.msra.mxu0 0.0
    %880 = vmatprep.subr.mxu0 0.0
    %881 = vmatpush1.msra.mxu0 0.0
    %882 = vmatprep.subr.mxu0 0.0
    %883 = vmatpush1.msra.mxu0 0.0
    %884 = vmatprep.subr.mxu0 0.0
    %885 = vmatpush1.msra.mxu0 0.0
    %886 = vmatprep.subr.mxu0 0.0
    %887 = vmatpush1.msra.mxu0 0.0
    %888 = vmatprep.subr.mxu0 0.0
    %889 = vmatpush1.msra.mxu0 0.0
    %890 = vmatprep.subr.mxu0 0.0
    %891 = vmatpush1.msra.mxu0 0.0
    %892 = vmatprep.subr.mxu0 0.0
    %893 = vmatpush1.msra.mxu0 0.0
    %894 = vmatprep.subr.mxu0 0.0
    %895 = vmatpush1.msra.mxu0 0.0
    %896 = vmatprep.subr.mxu0 0.0
    %897 = vmatpush1.msra.mxu0 0.0
    %898 = vmatprep.subr.mxu0 0.0
    %899 = vmatpush1.msra.mxu0 0.0
    %900 = vmatprep.subr.mxu0 0.0
    %901 = vmatpush1.msra.mxu0 0.0
    %902 = vmatprep.subr.mxu0 0.0
    %903 = vmatpush1.msra.mxu0 0.0
    %904 = vmatprep.subr.mxu0 0.0
    %905 = vmatpush1.msra.mxu0 0.0
    %906 = vmatprep.mubr.f32.mxu0 0.0
    %907 = vmatmul.mubr.f32.gmra.mrb[0].mxu0 %v837
    %v908 = vpop.f32.mrb[0].mxu0
    %v909 = vadd.f32 0.0, %v908
    %v910 = vpop.f32.mrb[0].mxu0
    %v911 = vadd.f32 0.0, %v910
    %912 = vmatprep.mubr.f32.mxu0 0.0
    %913 = vmatmul.mubr.f32.gmra.mrb[0].mxu0 %v840
    %v914 = vpop.f32.mrb[0].mxu0
    %v915 = vadd.f32 0.0, %v914
    %v916 = vpop.f32.mrb[0].mxu0
    %v917 = vadd.f32 0.0, %v916
    %918 = vdwg.mxu0
    %v919 = vld [vmem:[#allocation7] sm:$0xff]
    %v920 = vld [vmem:[#allocation7 + $0x8] sm:$0xff]
    %v921 = vld [vmem:[#allocation7 + $0x10] sm:$0xff]
    %v922 = vld [vmem:[#allocation7 + $0x18] sm:$0xff]
    %v923 = vld [vmem:[#allocation7 + $0x20] sm:$0xff]
    %v924 = vld [vmem:[#allocation7 + $0x28] sm:$0xff]
    %v925 = vld [vmem:[#allocation7 + $0x30] sm:$0xff]
    %v926 = vld [vmem:[#allocation7 + $0x38] sm:$0xff]
    %v927 = vld [vmem:[#allocation7 + $0x40] sm:$0xff]
    %v928 = vld [vmem:[#allocation7 + $0x48] sm:$0xff]
    %v929 = vld [vmem:[#allocation7 + $0x50] sm:$0xff]
    %v930 = vld [vmem:[#allocation7 + $0x58] sm:$0xff]
    %v931 = vld [vmem:[#allocation7 + $0x60] sm:$0xff]
    %v932 = vld [vmem:[#allocation7 + $0x68] sm:$0xff]
    %v933 = vld [vmem:[#allocation7 + $0x70] sm:$0xff]
    %v934 = vld [vmem:[#allocation7 + $0x78] sm:$0xff]
    %v935 = vld [vmem:[#allocation7 + $0x80] sm:$0xff]
    %v936 = vld [vmem:[#allocation7 + $0x88] sm:$0xff]
    %v937 = vld [vmem:[#allocation7 + $0x90] sm:$0xff]
    %v938 = vld [vmem:[#allocation7 + $0x98] sm:$0xff]
    %v939 = vld [vmem:[#allocation7 + $0xa0] sm:$0xff]
    %v940 = vld [vmem:[#allocation7 + $0xa8] sm:$0xff]
    %v941 = vld [vmem:[#allocation7 + $0xb0] sm:$0xff]
    %v942 = vld [vmem:[#allocation7 + $0xb8] sm:$0xff]
    %v943 = vld [vmem:[#allocation7 + $0xc0] sm:$0xff]
    %v944 = vld [vmem:[#allocation7 + $0xc8] sm:$0xff]
    %v945 = vld [vmem:[#allocation7 + $0xd0] sm:$0xff]
    %v946 = vld [vmem:[#allocation7 + $0xd8] sm:$0xff]
    %v947 = vld [vmem:[#allocation7 + $0xe0] sm:$0xff]
    %v948 = vld [vmem:[#allocation7 + $0xe8] sm:$0xff]
    %v949 = vld [vmem:[#allocation7 + $0xf0] sm:$0xff]
    %v950 = vld [vmem:[#allocation7 + $0xf8] sm:$0xff]
    %951 = vmatprep.subr.mxu0 0.0
    %952 = vmatpush1.msra.mxu0 %v919
    %953 = vmatprep.subr.mxu0 0.0
    %954 = vmatpush1.msra.mxu0 %v920
    %955 = vmatprep.subr.mxu0 0.0
    %956 = vmatpush1.msra.mxu0 %v921
    %957 = vmatprep.subr.mxu0 0.0
    %958 = vmatpush1.msra.mxu0 %v922
    %959 = vmatprep.subr.mxu0 0.0
    %960 = vmatpush1.msra.mxu0 %v923
    %961 = vmatprep.subr.mxu0 0.0
    %962 = vmatpush1.msra.mxu0 %v924
    %963 = vmatprep.subr.mxu0 0.0
    %964 = vmatpush1.msra.mxu0 %v925
    %965 = vmatprep.subr.mxu0 0.0
    %966 = vmatpush1.msra.mxu0 %v926
    %967 = vmatprep.subr.mxu0 0.0
    %968 = vmatpush1.msra.mxu0 %v927
    %969 = vmatprep.subr.mxu0 0.0
    %970 = vmatpush1.msra.mxu0 %v928
    %971 = vmatprep.subr.mxu0 0.0
    %972 = vmatpush1.msra.mxu0 %v929
    %973 = vmatprep.subr.mxu0 0.0
    %974 = vmatpush1.msra.mxu0 %v930
    %975 = vmatprep.subr.mxu0 0.0
    %976 = vmatpush1.msra.mxu0 %v931
    %977 = vmatprep.subr.mxu0 0.0
    %978 = vmatpush1.msra.mxu0 %v932
    %979 = vmatprep.subr.mxu0 0.0
    %980 = vmatpush1.msra.mxu0 %v933
    %981 = vmatprep.subr.mxu0 0.0
    %982 = vmatpush1.msra.mxu0 %v934
    %983 = vmatprep.subr.mxu0 0.0
    %984 = vmatpush1.msra.mxu0 %v935
    %985 = vmatprep.subr.mxu0 0.0
    %986 = vmatpush1.msra.mxu0 %v936
    %987 = vmatprep.subr.mxu0 0.0
    %988 = vmatpush1.msra.mxu0 %v937
    %989 = vmatprep.subr.mxu0 0.0
    %990 = vmatpush1.msra.mxu0 %v938
    %991 = vmatprep.subr.mxu0 0.0
    %992 = vmatpush1.msra.mxu0 %v939
    %993 = vmatprep.subr.mxu0 0.0
    %994 = vmatpush1.msra.mxu0 %v940
    %995 = vmatprep.subr.mxu0 0.0
    %996 = vmatpush1.msra.mxu0 %v941
    %997 = vmatprep.subr.mxu0 0.0
    %998 = vmatpush1.msra.mxu0 %v942
    %999 = vmatprep.subr.mxu0 0.0
    %1000 = vmatpush1.msra.mxu0 %v943
    %1001 = vmatprep.subr.mxu0 0.0
    %1002 = vmatpush1.msra.mxu0 %v944
    %1003 = vmatprep.subr.mxu0 0.0
    %1004 = vmatpush1.msra.mxu0 %v945
    %1005 = vmatprep.subr.mxu0 0.0
    %1006 = vmatpush1.msra.mxu0 %v946
    %1007 = vmatprep.subr.mxu0 0.0
    %1008 = vmatpush1.msra.mxu0 %v947
    %1009 = vmatprep.subr.mxu0 0.0
    %1010 = vmatpush1.msra.mxu0 %v948
    %1011 = vmatprep.subr.mxu0 0.0
    %1012 = vmatpush1.msra.mxu0 %v949
    %1013 = vmatprep.subr.mxu0 0.0
    %1014 = vmatpush1.msra.mxu0 %v950
    %1015 = vmatprep.mubr.f32.mxu0 %v911
    %1016 = vmatmul.mubr.f32.gmra.mrb[0].mxu0 %v909
    %v1017 = vpop.f32.mrb[0].mxu0
    %v1018 = vadd.f32 0.0, %v1017
    %v1019 = vpop.f32.mrb[0].mxu0
    %1020 = vmatprep.mubr.f32.mxu0 %v917
    %1021 = vmatmul.mubr.f32.gmra.mrb[0].mxu0 %v915
    %v1022 = vpop.f32.mrb[0].mxu0
    %v1023 = vadd.f32 0.0, %v1022
    %v1024 = vpop.f32.mrb[0].mxu0
    %1025 = vdwg.mxu0
    %v1026 = vrot.slane %v1018, 7
    %v1027 = vrot.slane %v1023, 7
    %v1028 = vsel %vm101, %v1026, %v1027
    %v1029 = vsel %vm101, %v1027, %v1026
    %v1030 = vsel %vm95, %v1029, 0.0
    %v1031 = vsel %vm96, %v1028, 0.0
    %v1032 = vrot.slane %v1018, 1
    %v1033 = vrot.slane %v1023, 1
    %v1034 = vsel %vm108, %v1032, %v1033
    %v1035 = vsel %vm108, %v1033, %v1032
    %v1036 = vsel %vm97, %v1034, 0.0
    %v1037 = vsel %vm98, %v1035, 0.0
    %v1038 = vld [vmem:[#allocation2] sm:$0xff]
    %v1039 = vld [vmem:[#allocation2 + $0x8] sm:$0xff]
    %v1040 = vld [vmem:[#allocation2 + $0x10] sm:$0xff]
    %v1041 = vld [vmem:[#allocation2 + $0x18] sm:$0xff]
    %v1042 = vld [vmem:[#allocation2 + $0x20] sm:$0xff]
    %v1043 = vld [vmem:[#allocation2 + $0x28] sm:$0xff]
    %v1044 = vld [vmem:[#allocation2 + $0x30] sm:$0xff]
    %v1045 = vld [vmem:[#allocation2 + $0x38] sm:$0xff]
    %v1046 = vld [vmem:[#allocation2 + $0x40] sm:$0xff]
    %v1047 = vld [vmem:[#allocation2 + $0x48] sm:$0xff]
    %v1048 = vld [vmem:[#allocation2 + $0x50] sm:$0xff]
    %v1049 = vld [vmem:[#allocation2 + $0x58] sm:$0xff]
    %v1050 = vld [vmem:[#allocation2 + $0x60] sm:$0xff]
    %v1051 = vld [vmem:[#allocation2 + $0x68] sm:$0xff]
    %v1052 = vld [vmem:[#allocation2 + $0x70] sm:$0xff]
    %v1053 = vld [vmem:[#allocation2 + $0x78] sm:$0xff]
    %s1054 = scalar_lea.vmem [#allocation2], 128
    %v1055 = vld [vmem:[%s1054] sm:$0xff]
    %v1056 = vld [vmem:[%s1054 + $0x8] sm:$0xff]
    %v1057 = vld [vmem:[%s1054 + $0x10] sm:$0xff]
    %v1058 = vld [vmem:[%s1054 + $0x18] sm:$0xff]
    %v1059 = vld [vmem:[%s1054 + $0x20] sm:$0xff]
    %v1060 = vld [vmem:[%s1054 + $0x28] sm:$0xff]
    %v1061 = vld [vmem:[%s1054 + $0x30] sm:$0xff]
    %v1062 = vld [vmem:[%s1054 + $0x38] sm:$0xff]
    %v1063 = vld [vmem:[%s1054 + $0x40] sm:$0xff]
    %v1064 = vld [vmem:[%s1054 + $0x48] sm:$0xff]
    %v1065 = vld [vmem:[%s1054 + $0x50] sm:$0xff]
    %v1066 = vld [vmem:[%s1054 + $0x58] sm:$0xff]
    %v1067 = vld [vmem:[%s1054 + $0x60] sm:$0xff]
    %v1068 = vld [vmem:[%s1054 + $0x68] sm:$0xff]
    %v1069 = vld [vmem:[%s1054 + $0x70] sm:$0xff]
    %v1070 = vld [vmem:[%s1054 + $0x78] sm:$0xff]
    %1071 = vmatprep.subr.mxu0 0.0
    %1072 = vmatpush1.msra.mxu0 %v1055
    %1073 = vmatprep.subr.mxu0 0.0
    %1074 = vmatpush1.msra.mxu0 %v1056
    %1075 = vmatprep.subr.mxu0 0.0
    %1076 = vmatpush1.msra.mxu0 %v1057
    %1077 = vmatprep.subr.mxu0 0.0
    %1078 = vmatpush1.msra.mxu0 %v1058
    %1079 = vmatprep.subr.mxu0 0.0
    %1080 = vmatpush1.msra.mxu0 %v1059
    %1081 = vmatprep.subr.mxu0 0.0
    %1082 = vmatpush1.msra.mxu0 %v1060
    %1083 = vmatprep.subr.mxu0 0.0
    %1084 = vmatpush1.msra.mxu0 %v1061
    %1085 = vmatprep.subr.mxu0 0.0
    %1086 = vmatpush1.msra.mxu0 %v1062
    %1087 = vmatprep.subr.mxu0 0.0
    %1088 = vmatpush1.msra.mxu0 %v1063
    %1089 = vmatprep.subr.mxu0 0.0
    %1090 = vmatpush1.msra.mxu0 %v1064
    %1091 = vmatprep.subr.mxu0 0.0
    %1092 = vmatpush1.msra.mxu0 %v1065
    %1093 = vmatprep.subr.mxu0 0.0
    %1094 = vmatpush1.msra.mxu0 %v1066
    %1095 = vmatprep.subr.mxu0 0.0
    %1096 = vmatpush1.msra.mxu0 %v1067
    %1097 = vmatprep.subr.mxu0 0.0
    %1098 = vmatpush1.msra.mxu0 %v1068
    %1099 = vmatprep.subr.mxu0 0.0
    %1100 = vmatpush1.msra.mxu0 %v1069
    %1101 = vmatprep.subr.mxu0 0.0
    %1102 = vmatpush1.msra.mxu0 %v1070
    %1103 = vmatprep.subr.mxu0 0.0
    %1104 = vmatpush1.msra.mxu0 0.0
    %1105 = vmatprep.subr.mxu0 0.0
    %1106 = vmatpush1.msra.mxu0 0.0
    %1107 = vmatprep.subr.mxu0 0.0
    %1108 = vmatpush1.msra.mxu0 0.0
    %1109 = vmatprep.subr.mxu0 0.0
    %1110 = vmatpush1.msra.mxu0 0.0
    %1111 = vmatprep.subr.mxu0 0.0
    %1112 = vmatpush1.msra.mxu0 0.0
    %1113 = vmatprep.subr.mxu0 0.0
    %1114 = vmatpush1.msra.mxu0 0.0
    %1115 = vmatprep.subr.mxu0 0.0
    %1116 = vmatpush1.msra.mxu0 0.0
    %1117 = vmatprep.subr.mxu0 0.0
    %1118 = vmatpush1.msra.mxu0 0.0
    %1119 = vmatprep.subr.mxu0 0.0
    %1120 = vmatpush1.msra.mxu0 0.0
    %1121 = vmatprep.subr.mxu0 0.0
    %1122 = vmatpush1.msra.mxu0 0.0
    %1123 = vmatprep.subr.mxu0 0.0
    %1124 = vmatpush1.msra.mxu0 0.0
    %1125 = vmatprep.subr.mxu0 0.0
    %1126 = vmatpush1.msra.mxu0 0.0
    %1127 = vmatprep.subr.mxu0 0.0
    %1128 = vmatpush1.msra.mxu0 0.0
    %1129 = vmatprep.subr.mxu0 0.0
    %1130 = vmatpush1.msra.mxu0 0.0
    %1131 = vmatprep.subr.mxu0 0.0
    %1132 = vmatpush1.msra.mxu0 0.0
    %1133 = vmatprep.subr.mxu0 0.0
    %1134 = vmatpush1.msra.mxu0 0.0
    %1135 = vmatprep.mubr.f32.mxu0 0.0
    %1136 = vmatmul.mubr.f32.gmra.mrb[0].mxu0 %v1018
    %v1137 = vpop.f32.mrb[0].mxu0
    %v1138 = vadd.f32 0.0, %v1137
    %v1139 = vpop.f32.mrb[0].mxu0
    %1140 = vmatprep.mubr.f32.mxu0 0.0
    %1141 = vmatmul.mubr.f32.gmra.mrb[0].mxu0 %v1023
    %v1142 = vpop.f32.mrb[0].mxu0
    %v1143 = vadd.f32 0.0, %v1142
    %v1144 = vpop.f32.mrb[0].mxu0
    %1145 = vdwg.mxu0
    %1146 = vmatprep.subr.mxu0 0.0
    %1147 = vmatpush1.msra.mxu0 %v1038
    %1148 = vmatprep.subr.mxu0 0.0
    %1149 = vmatpush1.msra.mxu0 %v1039
    %1150 = vmatprep.subr.mxu0 0.0
    %1151 = vmatpush1.msra.mxu0 %v1040
    %1152 = vmatprep.subr.mxu0 0.0
    %1153 = vmatpush1.msra.mxu0 %v1041
    %1154 = vmatprep.subr.mxu0 0.0
    %1155 = vmatpush1.msra.mxu0 %v1042
    %1156 = vmatprep.subr.mxu0 0.0
    %1157 = vmatpush1.msra.mxu0 %v1043
    %1158 = vmatprep.subr.mxu0 0.0
    %1159 = vmatpush1.msra.mxu0 %v1044
    %1160 = vmatprep.subr.mxu0 0.0
    %1161 = vmatpush1.msra.mxu0 %v1045
    %1162 = vmatprep.subr.mxu0 0.0
    %1163 = vmatpush1.msra.mxu0 %v1046
    %1164 = vmatprep.subr.mxu0 0.0
    %1165 = vmatpush1.msra.mxu0 %v1047
    %1166 = vmatprep.subr.mxu0 0.0
    %1167 = vmatpush1.msra.mxu0 %v1048
    %1168 = vmatprep.subr.mxu0 0.0
    %1169 = vmatpush1.msra.mxu0 %v1049
    %1170 = vmatprep.subr.mxu0 0.0
    %1171 = vmatpush1.msra.mxu0 %v1050
    %1172 = vmatprep.subr.mxu0 0.0
    %1173 = vmatpush1.msra.mxu0 %v1051
    %1174 = vmatprep.subr.mxu0 0.0
    %1175 = vmatpush1.msra.mxu0 %v1052
    %1176 = vmatprep.subr.mxu0 0.0
    %1177 = vmatpush1.msra.mxu0 %v1053
    %1178 = vmatprep.subr.mxu0 0.0
    %1179 = vmatpush1.msra.mxu0 0.0
    %1180 = vmatprep.subr.mxu0 0.0
    %1181 = vmatpush1.msra.mxu0 0.0
    %1182 = vmatprep.subr.mxu0 0.0
    %1183 = vmatpush1.msra.mxu0 0.0
    %1184 = vmatprep.subr.mxu0 0.0
    %1185 = vmatpush1.msra.mxu0 0.0
    %1186 = vmatprep.subr.mxu0 0.0
    %1187 = vmatpush1.msra.mxu0 0.0
    %1188 = vmatprep.subr.mxu0 0.0
    %1189 = vmatpush1.msra.mxu0 0.0
    %1190 = vmatprep.subr.mxu0 0.0
    %1191 = vmatpush1.msra.mxu0 0.0
    %1192 = vmatprep.subr.mxu0 0.0
    %1193 = vmatpush1.msra.mxu0 0.0
    %1194 = vmatprep.subr.mxu0 0.0
    %1195 = vmatpush1.msra.mxu0 0.0
    %1196 = vmatprep.subr.mxu0 0.0
    %1197 = vmatpush1.msra.mxu0 0.0
    %1198 = vmatprep.subr.mxu0 0.0
    %1199 = vmatpush1.msra.mxu0 0.0
    %1200 = vmatprep.subr.mxu0 0.0
    %1201 = vmatpush1.msra.mxu0 0.0
    %1202 = vmatprep.subr.mxu0 0.0
    %1203 = vmatpush1.msra.mxu0 0.0
    %1204 = vmatprep.subr.mxu0 0.0
    %1205 = vmatpush1.msra.mxu0 0.0
    %1206 = vmatprep.subr.mxu0 0.0
    %1207 = vmatpush1.msra.mxu0 0.0
    %1208 = vmatprep.subr.mxu0 0.0
    %1209 = vmatpush1.msra.mxu0 0.0
    %1210 = vmatprep.mubr.f32.mxu0 0.0
    %1211 = vmatmul.mubr.f32.gmra.mrb[0].mxu0 %v1030
    %v1212 = vpop.f32.mrb[0].mxu0
    %v1213 = vadd.f32 %v1138, %v1212
    %v1214 = vpop.f32.mrb[0].mxu0
    %1215 = vmatprep.mubr.f32.mxu0 0.0
    %1216 = vmatmul.mubr.f32.gmra.mrb[0].mxu0 %v1031
    %v1217 = vpop.f32.mrb[0].mxu0
    %v1218 = vadd.f32 %v1143, %v1217
    %v1219 = vpop.f32.mrb[0].mxu0
    %1220 = vdwg.mxu0
    %s1221 = scalar_lea.vmem [#allocation2], 256
    %v1222 = vld [vmem:[%s1221] sm:$0xff]
    %v1223 = vld [vmem:[%s1221 + $0x8] sm:$0xff]
    %v1224 = vld [vmem:[%s1221 + $0x10] sm:$0xff]
    %v1225 = vld [vmem:[%s1221 + $0x18] sm:$0xff]
    %v1226 = vld [vmem:[%s1221 + $0x20] sm:$0xff]
    %v1227 = vld [vmem:[%s1221 + $0x28] sm:$0xff]
    %v1228 = vld [vmem:[%s1221 + $0x30] sm:$0xff]
    %v1229 = vld [vmem:[%s1221 + $0x38] sm:$0xff]
    %v1230 = vld [vmem:[%s1221 + $0x40] sm:$0xff]
    %v1231 = vld [vmem:[%s1221 + $0x48] sm:$0xff]
    %v1232 = vld [vmem:[%s1221 + $0x50] sm:$0xff]
    %v1233 = vld [vmem:[%s1221 + $0x58] sm:$0xff]
    %v1234 = vld [vmem:[%s1221 + $0x60] sm:$0xff]
    %v1235 = vld [vmem:[%s1221 + $0x68] sm:$0xff]
    %v1236 = vld [vmem:[%s1221 + $0x70] sm:$0xff]
    %v1237 = vld [vmem:[%s1221 + $0x78] sm:$0xff]
    %1238 = vmatprep.subr.mxu0 0.0
    %1239 = vmatpush1.msra.mxu0 %v1222
    %1240 = vmatprep.subr.mxu0 0.0
    %1241 = vmatpush1.msra.mxu0 %v1223
    %1242 = vmatprep.subr.mxu0 0.0
    %1243 = vmatpush1.msra.mxu0 %v1224
    %1244 = vmatprep.subr.mxu0 0.0
    %1245 = vmatpush1.msra.mxu0 %v1225
    %1246 = vmatprep.subr.mxu0 0.0
    %1247 = vmatpush1.msra.mxu0 %v1226
    %1248 = vmatprep.subr.mxu0 0.0
    %1249 = vmatpush1.msra.mxu0 %v1227
    %1250 = vmatprep.subr.mxu0 0.0
    %1251 = vmatpush1.msra.mxu0 %v1228
    %1252 = vmatprep.subr.mxu0 0.0
    %1253 = vmatpush1.msra.mxu0 %v1229
    %1254 = vmatprep.subr.mxu0 0.0
    %1255 = vmatpush1.msra.mxu0 %v1230
    %1256 = vmatprep.subr.mxu0 0.0
    %1257 = vmatpush1.msra.mxu0 %v1231
    %1258 = vmatprep.subr.mxu0 0.0
    %1259 = vmatpush1.msra.mxu0 %v1232
    %1260 = vmatprep.subr.mxu0 0.0
    %1261 = vmatpush1.msra.mxu0 %v1233
    %1262 = vmatprep.subr.mxu0 0.0
    %1263 = vmatpush1.msra.mxu0 %v1234
    %1264 = vmatprep.subr.mxu0 0.0
    %1265 = vmatpush1.msra.mxu0 %v1235
    %1266 = vmatprep.subr.mxu0 0.0
    %1267 = vmatpush1.msra.mxu0 %v1236
    %1268 = vmatprep.subr.mxu0 0.0
    %1269 = vmatpush1.msra.mxu0 %v1237
    %1270 = vmatprep.subr.mxu0 0.0
    %1271 = vmatpush1.msra.mxu0 0.0
    %1272 = vmatprep.subr.mxu0 0.0
    %1273 = vmatpush1.msra.mxu0 0.0
    %1274 = vmatprep.subr.mxu0 0.0
    %1275 = vmatpush1.msra.mxu0 0.0
    %1276 = vmatprep.subr.mxu0 0.0
    %1277 = vmatpush1.msra.mxu0 0.0
    %1278 = vmatprep.subr.mxu0 0.0
    %1279 = vmatpush1.msra.mxu0 0.0
    %1280 = vmatprep.subr.mxu0 0.0
    %1281 = vmatpush1.msra.mxu0 0.0
    %1282 = vmatprep.subr.mxu0 0.0
    %1283 = vmatpush1.msra.mxu0 0.0
    %1284 = vmatprep.subr.mxu0 0.0
    %1285 = vmatpush1.msra.mxu0 0.0
    %1286 = vmatprep.subr.mxu0 0.0
    %1287 = vmatpush1.msra.mxu0 0.0
    %1288 = vmatprep.subr.mxu0 0.0
    %1289 = vmatpush1.msra.mxu0 0.0
    %1290 = vmatprep.subr.mxu0 0.0
    %1291 = vmatpush1.msra.mxu0 0.0
    %1292 = vmatprep.subr.mxu0 0.0
    %1293 = vmatpush1.msra.mxu0 0.0
    %1294 = vmatprep.subr.mxu0 0.0
    %1295 = vmatpush1.msra.mxu0 0.0
    %1296 = vmatprep.subr.mxu0 0.0
    %1297 = vmatpush1.msra.mxu0 0.0
    %1298 = vmatprep.subr.mxu0 0.0
    %1299 = vmatpush1.msra.mxu0 0.0
    %1300 = vmatprep.subr.mxu0 0.0
    %1301 = vmatpush1.msra.mxu0 0.0
    %1302 = vmatprep.mubr.f32.mxu0 0.0
    %1303 = vmatmul.mubr.f32.gmra.mrb[0].mxu0 %v1036
    %v1304 = vpop.f32.mrb[0].mxu0
    %v1305 = vadd.f32 0.0, %v1304
    %v1306 = vpop.f32.mrb[0].mxu0
    %1307 = vmatprep.mubr.f32.mxu0 0.0
    %1308 = vmatmul.mubr.f32.gmra.mrb[0].mxu0 %v1037
    %v1309 = vpop.f32.mrb[0].mxu0
    %v1310 = vadd.f32 0.0, %v1309
    %v1311 = vpop.f32.mrb[0].mxu0
    %1312 = vdwg.mxu0
    %v1313 = vadd.f32 %v1213, %v1305
    %v1314 = vadd.f32 %v1218, %v1310
    %v1315 = vadd.f32 %v1313, %v1314
    %v1316 = vrot.slane %v1315, 4
    %v1317 = vadd.f32 %v1315, %v1316
    %v1318 = vrot.slane %v1317, 2
    %v1319 = vadd.f32 %v1317, %v1318
    %v1320 = vrot.slane %v1319, 1
    %v1321 = vadd.f32 %v1319, %v1320
    %1322 = vmatprep.subr.mxu0 0.0
    %1323 = vmatpush1.msra.mxu0 %v397
    %1324 = vmatprep.subr.mxu0 0.0
    %1325 = vmatpush1.msra.mxu0 %v398
    %1326 = vmatprep.subr.mxu0 0.0
    %1327 = vmatpush1.msra.mxu0 %v399
    %1328 = vmatprep.subr.mxu0 0.0
    %1329 = vmatpush1.msra.mxu0 %v400
    %1330 = vmatprep.subr.mxu0 0.0
    %1331 = vmatpush1.msra.mxu0 %v401
    %1332 = vmatprep.subr.mxu0 0.0
    %1333 = vmatpush1.msra.mxu0 %v402
    %1334 = vmatprep.subr.mxu0 0.0
    %1335 = vmatpush1.msra.mxu0 %v403
    %1336 = vmatprep.subr.mxu0 0.0
    %1337 = vmatpush1.msra.mxu0 %v404
    %1338 = vmatprep.subr.mxu0 0.0
    %1339 = vmatpush1.msra.mxu0 %v405
    %1340 = vmatprep.subr.mxu0 0.0
    %1341 = vmatpush1.msra.mxu0 %v406
    %1342 = vmatprep.subr.mxu0 0.0
    %1343 = vmatpush1.msra.mxu0 %v407
    %1344 = vmatprep.subr.mxu0 0.0
    %1345 = vmatpush1.msra.mxu0 %v408
    %1346 = vmatprep.subr.mxu0 0.0
    %1347 = vmatpush1.msra.mxu0 %v409
    %1348 = vmatprep.subr.mxu0 0.0
    %1349 = vmatpush1.msra.mxu0 %v410
    %1350 = vmatprep.subr.mxu0 0.0
    %1351 = vmatpush1.msra.mxu0 %v411
    %1352 = vmatprep.subr.mxu0 0.0
    %1353 = vmatpush1.msra.mxu0 %v412
    %1354 = vmatprep.subr.mxu0 0.0
    %1355 = vmatpush1.msra.mxu0 0.0
    %1356 = vmatprep.subr.mxu0 0.0
    %1357 = vmatpush1.msra.mxu0 0.0
    %1358 = vmatprep.subr.mxu0 0.0
    %1359 = vmatpush1.msra.mxu0 0.0
    %1360 = vmatprep.subr.mxu0 0.0
    %1361 = vmatpush1.msra.mxu0 0.0
    %1362 = vmatprep.subr.mxu0 0.0
    %1363 = vmatpush1.msra.mxu0 0.0
    %1364 = vmatprep.subr.mxu0 0.0
    %1365 = vmatpush1.msra.mxu0 0.0
    %1366 = vmatprep.subr.mxu0 0.0
    %1367 = vmatpush1.msra.mxu0 0.0
    %1368 = vmatprep.subr.mxu0 0.0
    %1369 = vmatpush1.msra.mxu0 0.0
    %1370 = vmatprep.subr.mxu0 0.0
    %1371 = vmatpush1.msra.mxu0 0.0
    %1372 = vmatprep.subr.mxu0 0.0
    %1373 = vmatpush1.msra.mxu0 0.0
    %1374 = vmatprep.subr.mxu0 0.0
    %1375 = vmatpush1.msra.mxu0 0.0
    %1376 = vmatprep.subr.mxu0 0.0
    %1377 = vmatpush1.msra.mxu0 0.0
    %1378 = vmatprep.subr.mxu0 0.0
    %1379 = vmatpush1.msra.mxu0 0.0
    %1380 = vmatprep.subr.mxu0 0.0
    %1381 = vmatpush1.msra.mxu0 0.0
    %1382 = vmatprep.subr.mxu0 0.0
    %1383 = vmatpush1.msra.mxu0 0.0
    %1384 = vmatprep.subr.mxu0 0.0
    %1385 = vmatpush1.msra.mxu0 0.0
    %1386 = vmatprep.mubr.f32.mxu0 0.0
    %1387 = vmatmul.mubr.f32.gmra.mrb[0].mxu0 %v1321
    %v1388 = vpop.f32.mrb[0].mxu0
    %v1389 = vadd.f32 0.0, %v1388
    %v1390 = vpop.f32.mrb[0].mxu0
    %1391 = vdwg.mxu0
    %v1392 = vmul.f32 %v1389, 0.001953125
    %v1393 = vlaneseq
    %v1394 = vshrl.u32 %v1393, 7
    %v1395 = vsub.s32 0, %v1394
    %v1396 = vrot.slane %v1392, %v1395
    %v1397 = vsub.f32 %v1313, %v1396
    %v1398 = vsub.f32 %v1314, %v1396
    %v1399 = vmul.f32 %v1397, %v1397
    %v1400 = vmul.f32 %v1398, %v1398
    %v1401 = vadd.f32 %v1399, %v1400
    %v1402 = vrot.slane %v1401, 4
    %v1403 = vadd.f32 %v1401, %v1402
    %v1404 = vrot.slane %v1403, 2
    %v1405 = vadd.f32 %v1403, %v1404
    %v1406 = vrot.slane %v1405, 1
    %v1407 = vadd.f32 %v1405, %v1406
    %1408 = vmatprep.subr.mxu0 0.0
    %1409 = vmatpush1.msra.mxu0 %v397
    %1410 = vmatprep.subr.mxu0 0.0
    %1411 = vmatpush1.msra.mxu0 %v398
    %1412 = vmatprep.subr.mxu0 0.0
    %1413 = vmatpush1.msra.mxu0 %v399
    %1414 = vmatprep.subr.mxu0 0.0
    %1415 = vmatpush1.msra.mxu0 %v400
    %1416 = vmatprep.subr.mxu0 0.0
    %1417 = vmatpush1.msra.mxu0 %v401
    %1418 = vmatprep.subr.mxu0 0.0
    %1419 = vmatpush1.msra.mxu0 %v402
    %1420 = vmatprep.subr.mxu0 0.0
    %1421 = vmatpush1.msra.mxu0 %v403
    %1422 = vmatprep.subr.mxu0 0.0
    %1423 = vmatpush1.msra.mxu0 %v404
    %1424 = vmatprep.subr.mxu0 0.0
    %1425 = vmatpush1.msra.mxu0 %v405
    %1426 = vmatprep.subr.mxu0 0.0
    %1427 = vmatpush1.msra.mxu0 %v406
    %1428 = vmatprep.subr.mxu0 0.0
    %1429 = vmatpush1.msra.mxu0 %v407
    %1430 = vmatprep.subr.mxu0 0.0
    %1431 = vmatpush1.msra.mxu0 %v408
    %1432 = vmatprep.subr.mxu0 0.0
    %1433 = vmatpush1.msra.mxu0 %v409
    %1434 = vmatprep.subr.mxu0 0.0
    %1435 = vmatpush1.msra.mxu0 %v410
    %1436 = vmatprep.subr.mxu0 0.0
    %1437 = vmatpush1.msra.mxu0 %v411
    %1438 = vmatprep.subr.mxu0 0.0
    %1439 = vmatpush1.msra.mxu0 %v412
    %1440 = vmatprep.subr.mxu0 0.0
    %1441 = vmatpush1.msra.mxu0 0.0
    %1442 = vmatprep.subr.mxu0 0.0
    %1443 = vmatpush1.msra.mxu0 0.0
    %1444 = vmatprep.subr.mxu0 0.0
    %1445 = vmatpush1.msra.mxu0 0.0
    %1446 = vmatprep.subr.mxu0 0.0
    %1447 = vmatpush1.msra.mxu0 0.0
    %1448 = vmatprep.subr.mxu0 0.0
    %1449 = vmatpush1.msra.mxu0 0.0
    %1450 = vmatprep.subr.mxu0 0.0
    %1451 = vmatpush1.msra.mxu0 0.0
    %1452 = vmatprep.subr.mxu0 0.0
    %1453 = vmatpush1.msra.mxu0 0.0
    %1454 = vmatprep.subr.mxu0 0.0
    %1455 = vmatpush1.msra.mxu0 0.0
    %1456 = vmatprep.subr.mxu0 0.0
    %1457 = vmatpush1.msra.mxu0 0.0
    %1458 = vmatprep.subr.mxu0 0.0
    %1459 = vmatpush1.msra.mxu0 0.0
    %1460 = vmatprep.subr.mxu0 0.0
    %1461 = vmatpush1.msra.mxu0 0.0
    %1462 = vmatprep.subr.mxu0 0.0
    %1463 = vmatpush1.msra.mxu0 0.0
    %1464 = vmatprep.subr.mxu0 0.0
    %1465 = vmatpush1.msra.mxu0 0.0
    %1466 = vmatprep.subr.mxu0 0.0
    %1467 = vmatpush1.msra.mxu0 0.0
    %1468 = vmatprep.subr.mxu0 0.0
    %1469 = vmatpush1.msra.mxu0 0.0
    %1470 = vmatprep.subr.mxu0 0.0
    %1471 = vmatpush1.msra.mxu0 0.0
    %1472 = vmatprep.mubr.f32.mxu0 0.0
    %1473 = vmatmul.mubr.f32.gmra.mrb[0].mxu0 %v1407
    %v1474 = vpop.f32.mrb[0].mxu0
    %v1475 = vadd.f32 0.0, %v1474
    %v1476 = vpop.f32.mrb[0].mxu0
    %1477 = vdwg.mxu0
    %v1478 = vmul.f32 %v1475, 0.001953125
    %v1479 = vld [vmem:[%s5] sm:$0x3]
    %v1480 = vadd.f32 %v1478, 1e-05
    %v1481 = vrsqrt.pop %v1480
    %v1482 = vmul.f32 %v1479, %v1481
    %v1483 = vlaneseq
    %v1484 = vshrl.u32 %v1483, 7
    %v1485 = vsub.s32 0, %v1484
    %v1486 = vrot.slane %v1482, %v1485
    %v1487 = vmul.f32 %v1397, %v1486
    %v1488 = vmul.f32 %v1398, %v1486
    %v1489 = vlaneseq
    %v1490 = vshrl.u32 %v1489, 7
    %v1491 = vsub.s32 1, %v1490
    %v1492 = vrot.slane %v1479, %v1491
    %v1493 = vadd.f32 %v1487, %v1492
    %v1494 = vadd.f32 %v1488, %v1492
    %v1495 = vadd.f32 %v90, %v1493
    %v1496 = vadd.f32 %v91, %v1494
    %1497 = vst [vmem:[%s10] sm:$0xff] %v1495
    %1498 = vst [vmem:[%s10 + $0x8] sm:$0xff] %v1496
    // Predicated region
    $region58: #{residual_block_forward.1} parent=1 // pred_check
      _
    $region59: #{residual_block_forward.1} parent=1 // pred_check_branch
      %1500 = sbr.rel (0) target = $region61
    $region60: #{residual_block_forward.1} parent=1 // pred_region
      _
    $region61: #{residual_block_forward.1} parent=1 // pred_fallthru
      _
    // Predicated region
    $region62: #{residual_block_forward.1} parent=1 // pred_check
      _
    $region63: #{residual_block_forward.1} parent=1 // pred_check_branch
      %1502 = sbr.rel (0) target = $region65
    $region64: #{residual_block_forward.1} parent=1 // pred_region
      _
    $region65: #{residual_block_forward.1} parent=1 // pred_fallthru
      _
    %1503 = vsyncpa [#allocation3], 1
    %1504 = vsyncpa [#allocation5], 1
    %1505 = vsyncpa [#allocation8], 1

</llo_original>
